<compile_context>
chip_gen: v6e
topology: v6e:2x2x1
jax: 0.10.0
libtpu: 0.0.40
codegen_flags: <defaults>
</compile_context>

<pallas_src>
import functools

import jax
import jax.numpy as jnp
from jax import lax
from jax.experimental import pallas as pl
from jax.experimental.pallas import tpu as pltpu

# -------- "args" of the original module (synthetic, small) --------
N = 128            # number of nodes (adj.shape[0])
LATDIM = 64        # args.latdim
HEAD = 4           # args.head
DHEAD = LATDIM // HEAD
NNZ = 512          # number of edges in the synthetic sparse adjacency


def _gt_layer_kernel(adj_ref, x_ref, wqkv_ref, out_ref, *, head):
    """All heads in one invocation; writes a lane-dense (N, LATDIM) output."""
    lat = x_ref.shape[1]
    d = lat // head

    a = adj_ref[...].astype(jnp.float32)          # (N, N) 0/1 edge mask (bf16 in HBM)
    x = x_ref[...].astype(jnp.bfloat16)           # bf16 MXU operands, f32 accumulate
    wqkv = wqkv_ref[...].astype(jnp.bfloat16)     # (lat, 3*lat) fused [Wq | Wk | Wv]

    # One fused, lane-dense QKV projection instead of 12 width-16 matmuls.
    qkv = jnp.dot(x, wqkv, preferred_element_type=jnp.float32)   # (N, 3*lat) f32
    q = qkv[:, :lat]
    k = qkv[:, lat:2 * lat]
    v = qkv[:, 2 * lat:].astype(jnp.bfloat16)

    outs = []
    for h in range(head):                          # unrolled at trace time
        sl = slice(h * d, (h + 1) * d)
        qh = q[:, sl].astype(jnp.bfloat16)
        kh = k[:, sl].astype(jnp.bfloat16)
        vh = v[:, sl]

        # scores q_i . k_j without materializing k^T (contract dim 1 of both)
        s = lax.dot_general(qh, kh, (((1,), (1,)), ((), ())),
                            preferred_element_type=jnp.float32)   # (N, N)

        # clamp / exp (EUP), mask to graph edges
        e = jnp.exp(jnp.clip(s, -10.0, 10.0)) * a                 # (N, N)

        # per-source-row normalization applied AFTER the e@v matmul:
        # scale the small (N, d) result with an EUP reciprocal instead of
        # dividing the (N, N) matrix on the VALU.
        denom = jnp.sum(e, axis=1, keepdims=True) + 1e-8           # (N, 1)
        ov = jnp.dot(e.astype(jnp.bfloat16), vh,
                     preferred_element_type=jnp.float32)           # (N, d)
        outs.append(ov * pl.reciprocal(denom, approx=True))

    # single lane-dense (N, lat) store; column order h*d+t matches torch's
    # .view([-1, latdim]) head-major layout.
    out_ref[...] = jnp.concatenate(outs, axis=-1)


def gt_layer(adj_dense, embeds, wq, wk, wv, *, head=HEAD):
    """Dense-mask equivalent of GTLayer.forward(adj_sparse, embeds)."""
    n, lat = embeds.shape

    # fused [Wq | Wk | Wv]; head h of role r lives in columns r*lat + h*d.
    wqkv = jnp.concatenate([wq, wk, wv], axis=1)            # (lat, 3*lat)
    adj_bf16 = adj_dense.astype(jnp.bfloat16)               # 0/1 exact in bf16

    kernel = functools.partial(_gt_layer_kernel, head=head)
    return pl.pallas_call(
        kernel,
        out_shape=jax.ShapeDtypeStruct((n, lat), jnp.float32),
        grid=(1,),
        in_specs=[
            pl.BlockSpec((n, n), lambda i: (0, 0)),          # adjacency mask
            pl.BlockSpec((n, lat), lambda i: (0, 0)),        # embeddings
            pl.BlockSpec((lat, 3 * lat), lambda i: (0, 0)),  # fused Wqkv
        ],
        out_specs=pl.BlockSpec((n, lat), lambda i: (0, 0)),
        compiler_params=pltpu.CompilerParams(
            dimension_semantics=("arbitrary",)),
    )(adj_bf16, embeds, wqkv)


def _gt_layer_ref(a, x, wq, wk, wv, head):
    """Pure-JAX (f32) dense reference of the same edge-masked attention."""
    n, lat = x.shape
    d = lat // head
    q = (x @ wq).reshape(n, head, d)
    k = (x @ wk).reshape(n, head, d)
    v = (x @ wv).reshape(n, head, d)
    s = jnp.clip(jnp.einsum('ihd,jhd->ijh', q, k), -10.0, 10.0)
    e = jnp.exp(s) * a[:, :, None]
    att = e / (jnp.sum(e, axis=1, keepdims=True) + 1e-8)
    return jnp.einsum('ijh,jhd->ihd', att, v).reshape(n, lat)


if __name__ == "__main__":
    key = jax.random.PRNGKey(0)
    k1, k2, k3, k4, k5, k6 = jax.random.split(key, 6)

    # synthetic sparse adjacency (edge index list) -> dense 0/1 mask.
    # TODO(synk): a non-coalesced sparse adj with duplicate (row,col) entries
    # would weight duplicated edges twice in torch; dense mask collapses them.
    rows = jax.random.randint(k1, (NNZ,), 0, N)
    cols = jax.random.randint(k2, (NNZ,), 0, N)
    adj_dense = jnp.zeros((N, N), jnp.float32).at[rows, cols].set(1.0)

    # node embeddings and xavier_uniform-style square transforms
    embeds = 0.1 * jax.random.normal(k3, (N, LATDIM), jnp.float32)
    limit = (6.0 / (LATDIM + LATDIM)) ** 0.5
    wq = jax.random.uniform(k4, (LATDIM, LATDIM), jnp.float32, -limit, limit)
    wk = jax.random.uniform(k5, (LATDIM, LATDIM), jnp.float32, -limit, limit)
    wv = jax.random.uniform(k6, (LATDIM, LATDIM), jnp.float32, -limit, limit)

    out = gt_layer(adj_dense, embeds, wq, wk, wv, head=HEAD)
    jax.block_until_ready(out)

    ref = _gt_layer_ref(adj_dense, embeds, wq, wk, wv, HEAD)
    assert out.shape == (N, LATDIM)
    assert bool(jnp.all(jnp.isfinite(out)))
    # tolerance accounts for bf16 MXU operands + approx EUP reciprocal vs the
    # pure-f32 reference (observed error is well below this).
    assert bool(jnp.allclose(out, ref, rtol=5e-3, atol=5e-3))
    print("KERNEL_OK")
</pallas_src>

<mosaic_0001>
module attributes {stable_mosaic.version = 11 : i64} {
  func.func @_gt_layer_kernel(%arg0: i32, %arg1: memref<128x128xbf16, #tpu.memory_space<vmem>>, %arg2: memref<128x64xf32, #tpu.memory_space<vmem>>, %arg3: memref<64x192xf32, #tpu.memory_space<vmem>>, %arg4: memref<128x64xf32, #tpu.memory_space<vmem>>) attributes {dimension_semantics = [#tpu.dimension_semantics<arbitrary>], iteration_bounds = array<i64: 1>, scalar_prefetch = 0 : i64, scratch_operands = 0 : i64, tpu.core_type = #tpu.core_type<tc>, window_params = [{pipeline_mode = #tpu.pipeline_mode<synchronous>, transform_indices = @transform_0, window_bounds = array<i64: 128, 128>}, {pipeline_mode = #tpu.pipeline_mode<synchronous>, transform_indices = @transform_1, window_bounds = array<i64: 128, 64>}, {pipeline_mode = #tpu.pipeline_mode<synchronous>, transform_indices = @transform_2, window_bounds = array<i64: 64, 192>}, {pipeline_mode = #tpu.pipeline_mode<synchronous>, transform_indices = @transform_3, window_bounds = array<i64: 128, 64>}]} {
    %c0 = arith.constant 0 : index
    %c0_0 = arith.constant 0 : index
    %0 = vector.load %arg1[%c0, %c0_0] : memref<128x128xbf16, #tpu.memory_space<vmem>>, vector<128x128xbf16>
    %1 = arith.extf %0 : vector<128x128xbf16> to vector<128x128xf32>
    %c0_1 = arith.constant 0 : index
    %c0_2 = arith.constant 0 : index
    %2 = vector.load %arg2[%c0_1, %c0_2] : memref<128x64xf32, #tpu.memory_space<vmem>>, vector<128x64xf32>
    %3 = arith.truncf %2 : vector<128x64xf32> to vector<128x64xbf16>
    %c0_3 = arith.constant 0 : index
    %c0_4 = arith.constant 0 : index
    %4 = vector.load %arg3[%c0_3, %c0_4] : memref<64x192xf32, #tpu.memory_space<vmem>>, vector<64x192xf32>
    %5 = arith.truncf %4 : vector<64x192xf32> to vector<64x192xbf16>
    %cst = arith.constant dense<0.000000e+00> : vector<128x192xf32>
    %6 = tpu.matmul %3, %5, %cst {dimension_numbers = #tpu.dot_dimension_numbers<[1], [0], [0], [1], [0, 0, 1, 1], [], []>} : vector<128x64xbf16>, vector<64x192xbf16>, vector<128x192xf32> -> vector<128x192xf32>
    %7 = vector.extract_strided_slice %6 {offsets = [0, 0], sizes = [128, 64], strides = [1, 1]} : vector<128x192xf32> to vector<128x64xf32>
    %8 = vector.extract_strided_slice %6 {offsets = [0, 64], sizes = [128, 64], strides = [1, 1]} : vector<128x192xf32> to vector<128x64xf32>
    %9 = vector.extract_strided_slice %6 {offsets = [0, 128], sizes = [128, 64], strides = [1, 1]} : vector<128x192xf32> to vector<128x64xf32>
    %10 = arith.truncf %9 : vector<128x64xf32> to vector<128x64xbf16>
    %11 = vector.extract_strided_slice %7 {offsets = [0, 0], sizes = [128, 16], strides = [1, 1]} : vector<128x64xf32> to vector<128x16xf32>
    %12 = arith.truncf %11 : vector<128x16xf32> to vector<128x16xbf16>
    %13 = vector.extract_strided_slice %8 {offsets = [0, 0], sizes = [128, 16], strides = [1, 1]} : vector<128x64xf32> to vector<128x16xf32>
    %14 = arith.truncf %13 : vector<128x16xf32> to vector<128x16xbf16>
    %15 = vector.extract_strided_slice %10 {offsets = [0, 0], sizes = [128, 16], strides = [1, 1]} : vector<128x64xbf16> to vector<128x16xbf16>
    %cst_5 = arith.constant dense<0.000000e+00> : vector<128x128xf32>
    %16 = tpu.matmul %12, %14, %cst_5 {dimension_numbers = #tpu.dot_dimension_numbers<[1], [1], [0], [0], [0, 0, 1, 0], [], []>} : vector<128x16xbf16>, vector<128x16xbf16>, vector<128x128xf32> -> vector<128x128xf32>
    %cst_6 = arith.constant -1.000000e+01 : f32
    %cst_7 = arith.constant 1.000000e+01 : f32
    %17 = vector.broadcast %cst_6 : f32 to vector<128x128xf32>
    %18 = arith.maximumf %17, %16 : vector<128x128xf32>
    %19 = vector.broadcast %cst_7 : f32 to vector<128x128xf32>
    %20 = arith.minimumf %19, %18 : vector<128x128xf32>
    %21 = math.exp %20 : vector<128x128xf32>
    %22 = arith.mulf %21, %1 : vector<128x128xf32>
    %cst_8 = arith.constant dense<0.000000e+00> : vector<128xf32>
    %23 = vector.multi_reduction <add>, %22, %cst_8 [1] : vector<128x128xf32> to vector<128xf32>
    %24 = vector.shape_cast %23 : vector<128xf32> to vector<128x1xf32>
    %cst_9 = arith.constant 9.99999993E-9 : f32
    %25 = vector.broadcast %cst_9 : f32 to vector<128x1xf32>
    %26 = arith.addf %24, %25 : vector<128x1xf32>
    %27 = arith.truncf %22 : vector<128x128xf32> to vector<128x128xbf16>
    %cst_10 = arith.constant dense<0.000000e+00> : vector<128x16xf32>
    %28 = tpu.matmul %27, %15, %cst_10 {dimension_numbers = #tpu.dot_dimension_numbers<[1], [0], [0], [1], [0, 0, 1, 1], [], []>} : vector<128x128xbf16>, vector<128x16xbf16>, vector<128x16xf32> -> vector<128x16xf32>
    %29 = tpu.reciprocal %26 {approx = true} : vector<128x1xf32> -> vector<128x1xf32>
    %30 = vector.broadcast %29 : vector<128x1xf32> to vector<128x16xf32>
    %31 = arith.mulf %28, %30 : vector<128x16xf32>
    %32 = vector.extract_strided_slice %7 {offsets = [0, 16], sizes = [128, 16], strides = [1, 1]} : vector<128x64xf32> to vector<128x16xf32>
    %33 = arith.truncf %32 : vector<128x16xf32> to vector<128x16xbf16>
    %34 = vector.extract_strided_slice %8 {offsets = [0, 16], sizes = [128, 16], strides = [1, 1]} : vector<128x64xf32> to vector<128x16xf32>
    %35 = arith.truncf %34 : vector<128x16xf32> to vector<128x16xbf16>
    %36 = vector.extract_strided_slice %10 {offsets = [0, 16], sizes = [128, 16], strides = [1, 1]} : vector<128x64xbf16> to vector<128x16xbf16>
    %cst_11 = arith.constant dense<0.000000e+00> : vector<128x128xf32>
    %37 = tpu.matmul %33, %35, %cst_11 {dimension_numbers = #tpu.dot_dimension_numbers<[1], [1], [0], [0], [0, 0, 1, 0], [], []>} : vector<128x16xbf16>, vector<128x16xbf16>, vector<128x128xf32> -> vector<128x128xf32>
    %cst_12 = arith.constant -1.000000e+01 : f32
    %cst_13 = arith.constant 1.000000e+01 : f32
    %38 = vector.broadcast %cst_12 : f32 to vector<128x128xf32>
    %39 = arith.maximumf %38, %37 : vector<128x128xf32>
    %40 = vector.broadcast %cst_13 : f32 to vector<128x128xf32>
    %41 = arith.minimumf %40, %39 : vector<128x128xf32>
    %42 = math.exp %41 : vector<128x128xf32>
    %43 = arith.mulf %42, %1 : vector<128x128xf32>
    %cst_14 = arith.constant dense<0.000000e+00> : vector<128xf32>
    %44 = vector.multi_reduction <add>, %43, %cst_14 [1] : vector<128x128xf32> to vector<128xf32>
    %45 = vector.shape_cast %44 : vector<128xf32> to vector<128x1xf32>
    %cst_15 = arith.constant 9.99999993E-9 : f32
    %46 = vector.broadcast %cst_15 : f32 to vector<128x1xf32>
    %47 = arith.addf %45, %46 : vector<128x1xf32>
    %48 = arith.truncf %43 : vector<128x128xf32> to vector<128x128xbf16>
    %cst_16 = arith.constant dense<0.000000e+00> : vector<128x16xf32>
    %49 = tpu.matmul %48, %36, %cst_16 {dimension_numbers = #tpu.dot_dimension_numbers<[1], [0], [0], [1], [0, 0, 1, 1], [], []>} : vector<128x128xbf16>, vector<128x16xbf16>, vector<128x16xf32> -> vector<128x16xf32>
    %50 = tpu.reciprocal %47 {approx = true} : vector<128x1xf32> -> vector<128x1xf32>
    %51 = vector.broadcast %50 : vector<128x1xf32> to vector<128x16xf32>
    %52 = arith.mulf %49, %51 : vector<128x16xf32>
    %53 = vector.extract_strided_slice %7 {offsets = [0, 32], sizes = [128, 16], strides = [1, 1]} : vector<128x64xf32> to vector<128x16xf32>
    %54 = arith.truncf %53 : vector<128x16xf32> to vector<128x16xbf16>
    %55 = vector.extract_strided_slice %8 {offsets = [0, 32], sizes = [128, 16], strides = [1, 1]} : vector<128x64xf32> to vector<128x16xf32>
    %56 = arith.truncf %55 : vector<128x16xf32> to vector<128x16xbf16>
    %57 = vector.extract_strided_slice %10 {offsets = [0, 32], sizes = [128, 16], strides = [1, 1]} : vector<128x64xbf16> to vector<128x16xbf16>
    %cst_17 = arith.constant dense<0.000000e+00> : vector<128x128xf32>
    %58 = tpu.matmul %54, %56, %cst_17 {dimension_numbers = #tpu.dot_dimension_numbers<[1], [1], [0], [0], [0, 0, 1, 0], [], []>} : vector<128x16xbf16>, vector<128x16xbf16>, vector<128x128xf32> -> vector<128x128xf32>
    %cst_18 = arith.constant -1.000000e+01 : f32
    %cst_19 = arith.constant 1.000000e+01 : f32
    %59 = vector.broadcast %cst_18 : f32 to vector<128x128xf32>
    %60 = arith.maximumf %59, %58 : vector<128x128xf32>
    %61 = vector.broadcast %cst_19 : f32 to vector<128x128xf32>
    %62 = arith.minimumf %61, %60 : vector<128x128xf32>
    %63 = math.exp %62 : vector<128x128xf32>
    %64 = arith.mulf %63, %1 : vector<128x128xf32>
    %cst_20 = arith.constant dense<0.000000e+00> : vector<128xf32>
    %65 = vector.multi_reduction <add>, %64, %cst_20 [1] : vector<128x128xf32> to vector<128xf32>
    %66 = vector.shape_cast %65 : vector<128xf32> to vector<128x1xf32>
    %cst_21 = arith.constant 9.99999993E-9 : f32
    %67 = vector.broadcast %cst_21 : f32 to vector<128x1xf32>
    %68 = arith.addf %66, %67 : vector<128x1xf32>
    %69 = arith.truncf %64 : vector<128x128xf32> to vector<128x128xbf16>
    %cst_22 = arith.constant dense<0.000000e+00> : vector<128x16xf32>
    %70 = tpu.matmul %69, %57, %cst_22 {dimension_numbers = #tpu.dot_dimension_numbers<[1], [0], [0], [1], [0, 0, 1, 1], [], []>} : vector<128x128xbf16>, vector<128x16xbf16>, vector<128x16xf32> -> vector<128x16xf32>
    %71 = tpu.reciprocal %68 {approx = true} : vector<128x1xf32> -> vector<128x1xf32>
    %72 = vector.broadcast %71 : vector<128x1xf32> to vector<128x16xf32>
    %73 = arith.mulf %70, %72 : vector<128x16xf32>
    %74 = vector.extract_strided_slice %7 {offsets = [0, 48], sizes = [128, 16], strides = [1, 1]} : vector<128x64xf32> to vector<128x16xf32>
    %75 = arith.truncf %74 : vector<128x16xf32> to vector<128x16xbf16>
    %76 = vector.extract_strided_slice %8 {offsets = [0, 48], sizes = [128, 16], strides = [1, 1]} : vector<128x64xf32> to vector<128x16xf32>
    %77 = arith.truncf %76 : vector<128x16xf32> to vector<128x16xbf16>
    %78 = vector.extract_strided_slice %10 {offsets = [0, 48], sizes = [128, 16], strides = [1, 1]} : vector<128x64xbf16> to vector<128x16xbf16>
    %cst_23 = arith.constant dense<0.000000e+00> : vector<128x128xf32>
    %79 = tpu.matmul %75, %77, %cst_23 {dimension_numbers = #tpu.dot_dimension_numbers<[1], [1], [0], [0], [0, 0, 1, 0], [], []>} : vector<128x16xbf16>, vector<128x16xbf16>, vector<128x128xf32> -> vector<128x128xf32>
    %cst_24 = arith.constant -1.000000e+01 : f32
    %cst_25 = arith.constant 1.000000e+01 : f32
    %80 = vector.broadcast %cst_24 : f32 to vector<128x128xf32>
    %81 = arith.maximumf %80, %79 : vector<128x128xf32>
    %82 = vector.broadcast %cst_25 : f32 to vector<128x128xf32>
    %83 = arith.minimumf %82, %81 : vector<128x128xf32>
    %84 = math.exp %83 : vector<128x128xf32>
    %85 = arith.mulf %84, %1 : vector<128x128xf32>
    %cst_26 = arith.constant dense<0.000000e+00> : vector<128xf32>
    %86 = vector.multi_reduction <add>, %85, %cst_26 [1] : vector<128x128xf32> to vector<128xf32>
    %87 = vector.shape_cast %86 : vector<128xf32> to vector<128x1xf32>
    %cst_27 = arith.constant 9.99999993E-9 : f32
    %88 = vector.broadcast %cst_27 : f32 to vector<128x1xf32>
    %89 = arith.addf %87, %88 : vector<128x1xf32>
    %90 = arith.truncf %85 : vector<128x128xf32> to vector<128x128xbf16>
    %cst_28 = arith.constant dense<0.000000e+00> : vector<128x16xf32>
    %91 = tpu.matmul %90, %78, %cst_28 {dimension_numbers = #tpu.dot_dimension_numbers<[1], [0], [0], [1], [0, 0, 1, 1], [], []>} : vector<128x128xbf16>, vector<128x16xbf16>, vector<128x16xf32> -> vector<128x16xf32>
    %92 = tpu.reciprocal %89 {approx = true} : vector<128x1xf32> -> vector<128x1xf32>
    %93 = vector.broadcast %92 : vector<128x1xf32> to vector<128x16xf32>
    %94 = arith.mulf %91, %93 : vector<128x16xf32>
    %95 = tpu.concatenate %31, %52, %73, %94 in 1 : vector<128x16xf32>, vector<128x16xf32>, vector<128x16xf32>, vector<128x16xf32> -> vector<128x64xf32>
    %c0_29 = arith.constant 0 : index
    %c0_30 = arith.constant 0 : index
    %96 = vector.load %arg4[%c0_29, %c0_30] : memref<128x64xf32, #tpu.memory_space<vmem>>, vector<128x64xf32>
    tpu.vector_store %arg4[%c0_29, %c0_30], %95 {strides = array<i32>} : memref<128x64xf32, #tpu.memory_space<vmem>>, vector<128x64xf32>,
    return
  }
  func.func @transform_0(%arg0: i32) -> (i32, i32) {
    %c0_i32 = arith.constant 0 : i32
    %c0_i32_0 = arith.constant 0 : i32
    %c0_i32_1 = arith.constant 0 : i32
    return %c0_i32, %c0_i32_0 : i32, i32
  }
  func.func @transform_1(%arg0: i32) -> (i32, i32) {
    %c0_i32 = arith.constant 0 : i32
    %c0_i32_0 = arith.constant 0 : i32
    %c0_i32_1 = arith.constant 0 : i32
    return %c0_i32, %c0_i32_0 : i32, i32
  }
  func.func @transform_2(%arg0: i32) -> (i32, i32) {
    %c0_i32 = arith.constant 0 : i32
    %c0_i32_0 = arith.constant 0 : i32
    %c0_i32_1 = arith.constant 0 : i32
    return %c0_i32, %c0_i32_0 : i32, i32
  }
  func.func @transform_3(%arg0: i32) -> (i32, i32) {
    %c0_i32 = arith.constant 0 : i32
    %c0_i32_0 = arith.constant 0 : i32
    %c0_i32_1 = arith.constant 0 : i32
    return %c0_i32, %c0_i32_0 : i32, i32
  }
}

</mosaic_0001>

<llo_original>
// kernel: tpu_custom_call.1
$region0: #{tpu_custom_call.1}
  #allocation0 [shape = 'u32[]', space=smem, size = 0x4, offset = 0x4, fixed_abs, tag = 'smem constant byte address 0x4 - core index']
  #allocation1 [shape = 'u32[144,128]{1,0:T(1,128)}', space=vmem, size = 0x12000, scoped, tag = 'internal scratch']
  %s0 = inlined_call_operand.vmem [shape: bf16[128,128], index: 0, kind: input, shape index: {}]
  %s1 = inlined_call_operand.vmem [shape: f32[128,64], index: 1, kind: input, shape index: {}]
  %s2 = inlined_call_operand.vmem [shape: f32[64,192], index: 2, kind: input, shape index: {}]
  %s3 = inlined_call_operand.vmem [shape: f32[128,64], index: 3, kind: output, shape index: {}]
  %s4 = sld [smem:[#allocation0]]
  $region22: #{tpu_custom_call.1} parent=0
    _
  %s6 = ssub.s32 1, %s4
  %s7 = scalar_select 0, %s6, %s4
  // Predicated region
  $region2: #{tpu_custom_call.1} parent=0 // pred_check
    _
  $region3: #{tpu_custom_call.1} parent=0 // pred_check_branch
    %9 = sbr.rel (0) target = $region5
  $region4: #{tpu_custom_call.1} parent=0 // pred_region
    _
  $region5: #{tpu_custom_call.1} parent=0 // pred_fallthru
    _
  // Predicated region
  $region6: #{tpu_custom_call.1} parent=0 // pred_check
    _
  $region7: #{tpu_custom_call.1} parent=0 // pred_check_branch
    %11 = sbr.rel (0) target = $region9
  $region8: #{tpu_custom_call.1} parent=0 // pred_region
    _
  $region9: #{tpu_custom_call.1} parent=0 // pred_fallthru
    _
  // Predicated region
  $region10: #{tpu_custom_call.1} parent=0 // pred_check
    _
  $region11: #{tpu_custom_call.1} parent=0 // pred_check_branch
    %13 = sbr.rel (0) target = $region13
  $region12: #{tpu_custom_call.1} parent=0 // pred_region
    _
  $region13: #{tpu_custom_call.1} parent=0 // pred_fallthru
    _
  %v15 = vld [vmem:[%s0] sm:$0xf]
  %v16 = vld [vmem:[%s0 + $0x4] sm:$0xf]
  %v17 = vld [vmem:[%s0 + $0x8] sm:$0xf]
  %v18 = vld [vmem:[%s0 + $0xc] sm:$0xf]
  %v19 = vld [vmem:[%s0 + $0x10] sm:$0xf]
  %v20 = vld [vmem:[%s0 + $0x14] sm:$0xf]
  %v21 = vld [vmem:[%s0 + $0x18] sm:$0xf]
  %v22 = vld [vmem:[%s0 + $0x1c] sm:$0xf]
  %v23 = vld [vmem:[%s0 + $0x20] sm:$0xf]
  %v24 = vld [vmem:[%s0 + $0x24] sm:$0xf]
  %v25 = vld [vmem:[%s0 + $0x28] sm:$0xf]
  %v26 = vld [vmem:[%s0 + $0x2c] sm:$0xf]
  %v27 = vld [vmem:[%s0 + $0x30] sm:$0xf]
  %v28 = vld [vmem:[%s0 + $0x34] sm:$0xf]
  %v29 = vld [vmem:[%s0 + $0x38] sm:$0xf]
  %v30 = vld [vmem:[%s0 + $0x3c] sm:$0xf]
  %v31 = vunpack.c.l.bf16 %v15
  %v32 = vunpack.c.l.bf16 %v16
  %v33 = vunpack.c.l.bf16 %v17
  %v34 = vunpack.c.l.bf16 %v18
  %v35 = vunpack.c.l.bf16 %v19
  %v36 = vunpack.c.l.bf16 %v20
  %v37 = vunpack.c.l.bf16 %v21
  %v38 = vunpack.c.l.bf16 %v22
  %v39 = vunpack.c.l.bf16 %v23
  %v40 = vunpack.c.l.bf16 %v24
  %v41 = vunpack.c.l.bf16 %v25
  %v42 = vunpack.c.l.bf16 %v26
  %v43 = vunpack.c.l.bf16 %v27
  %v44 = vunpack.c.l.bf16 %v28
  %v45 = vunpack.c.l.bf16 %v29
  %v46 = vunpack.c.l.bf16 %v30
  %v47 = vld [vmem:[%s1] sm:$0xff]
  %v48 = vld [vmem:[%s1 + $0x8] sm:$0xff]
  %v49 = vld [vmem:[%s1 + $0x10] sm:$0xff]
  %v50 = vld [vmem:[%s1 + $0x18] sm:$0xff]
  %v51 = vld [vmem:[%s1 + $0x20] sm:$0xff]
  %v52 = vld [vmem:[%s1 + $0x28] sm:$0xff]
  %v53 = vld [vmem:[%s1 + $0x30] sm:$0xff]
  %v54 = vld [vmem:[%s1 + $0x38] sm:$0xff]
  %v55 = vld [vmem:[%s1 + $0x40] sm:$0xff]
  %v56 = vld [vmem:[%s1 + $0x48] sm:$0xff]
  %v57 = vld [vmem:[%s1 + $0x50] sm:$0xff]
  %v58 = vld [vmem:[%s1 + $0x58] sm:$0xff]
  %v59 = vld [vmem:[%s1 + $0x60] sm:$0xff]
  %v60 = vld [vmem:[%s1 + $0x68] sm:$0xff]
  %v61 = vld [vmem:[%s1 + $0x70] sm:$0xff]
  %v62 = vld [vmem:[%s1 + $0x78] sm:$0xff]
  %v63 = vpack.c.bf16 %v48, %v47
  %v64 = vpack.c.bf16 %v50, %v49
  %v65 = vpack.c.bf16 %v52, %v51
  %v66 = vpack.c.bf16 %v54, %v53
  %v67 = vpack.c.bf16 %v56, %v55
  %v68 = vpack.c.bf16 %v58, %v57
  %v69 = vpack.c.bf16 %v60, %v59
  %v70 = vpack.c.bf16 %v62, %v61
  %v71 = vld [vmem:[%s2] sm:$0xff]
  %v72 = vld [vmem:[%s2 + $0x8] sm:$0xff]
  %v73 = vld [vmem:[%s2 + $0x10] sm:$0xff]
  %v74 = vld [vmem:[%s2 + $0x18] sm:$0xff]
  %v75 = vld [vmem:[%s2 + $0x20] sm:$0xff]
  %v76 = vld [vmem:[%s2 + $0x28] sm:$0xff]
  %v77 = vld [vmem:[%s2 + $0x30] sm:$0xff]
  %v78 = vld [vmem:[%s2 + $0x38] sm:$0xff]
  %v79 = vld [vmem:[%s2 + $0x40] sm:$0xff]
  %v80 = vld [vmem:[%s2 + $0x48] sm:$0xff]
  %v81 = vld [vmem:[%s2 + $0x50] sm:$0xff]
  %v82 = vld [vmem:[%s2 + $0x58] sm:$0xff]
  %v83 = vld [vmem:[%s2 + $0x60] sm:$0xff]
  %v84 = vld [vmem:[%s2 + $0x68] sm:$0xff]
  %v85 = vld [vmem:[%s2 + $0x70] sm:$0xff]
  %v86 = vld [vmem:[%s2 + $0x78] sm:$0xff]
  %v87 = vpack.c.bf16 %v73, %v71
  %v88 = vpack.c.bf16 %v74, %v72
  %v89 = vpack.c.bf16 %v77, %v75
  %v90 = vpack.c.bf16 %v78, %v76
  %v91 = vpack.c.bf16 %v81, %v79
  %v92 = vpack.c.bf16 %v82, %v80
  %v93 = vpack.c.bf16 %v85, %v83
  %v94 = vpack.c.bf16 %v86, %v84
  %vm95 = vcmask 523264
  %v97 = vsel %vm95, %v63, 0
  %v100 = vsel %vm95, %v64, 0
  %v103 = vsel %vm95, %v65, 0
  %v106 = vsel %vm95, %v66, 0
  %v109 = vsel %vm95, %v67, 0
  %v112 = vsel %vm95, %v68, 0
  %v115 = vsel %vm95, %v69, 0
  %v118 = vsel %vm95, %v70, 0
  %120 = vmatprep.subr.bf16.mxu0 0
  %121 = vmatpush1.bf16.msra.mxu0 0
  %122 = vmatprep.subr.bf16.mxu0 0
  %123 = vmatpush1.bf16.msra.mxu0 0
  %124 = vmatprep.subr.bf16.mxu0 0
  %125 = vmatpush1.bf16.msra.mxu0 0
  %126 = vmatprep.subr.bf16.mxu0 0
  %127 = vmatpush1.bf16.msra.mxu0 0
  %128 = vmatprep.subr.bf16.mxu0 %v94
  %129 = vmatpush1.bf16.msra.mxu0 %v93
  %130 = vmatprep.subr.bf16.mxu0 %v92
  %131 = vmatpush1.bf16.msra.mxu0 %v91
  %132 = vmatprep.subr.bf16.mxu0 %v90
  %133 = vmatpush1.bf16.msra.mxu0 %v89
  %134 = vmatprep.subr.bf16.mxu0 %v88
  %135 = vmatpush1.bf16.msra.mxu0 %v87
  %136 = vmatprep.subr.bf16.mxu0 0
  %137 = vmatpush2.bf16.msra.mxu0 0
  %138 = vmatprep.subr.bf16.mxu0 0
  %139 = vmatpush2.bf16.msra.mxu0 0
  %140 = vmatprep.subr.bf16.mxu0 0
  %141 = vmatpush2.bf16.msra.mxu0 0
  %142 = vmatprep.subr.bf16.mxu0 0
  %143 = vmatpush2.bf16.msra.mxu0 0
  %144 = vmatprep.subr.bf16.mxu0 0
  %145 = vmatpush2.bf16.msra.mxu0 0
  %146 = vmatprep.subr.bf16.mxu0 0
  %147 = vmatpush2.bf16.msra.mxu0 0
  %148 = vmatprep.subr.bf16.mxu0 0
  %149 = vmatpush2.bf16.msra.mxu0 0
  %150 = vmatprep.subr.bf16.mxu0 0
  %151 = vmatpush2.bf16.msra.mxu0 0
  %152 = vmatprep.mubr.bf16.mxu0 0
  %153 = vmatmul.mubr.bf16.gmra.mxu0 %v97
  %v154 = vpop.f32.mrf.mxu0
  %v155 = vadd.f32 0.0, %v154
  %v156 = vpop.f32.mrf.mxu0
  %v157 = vadd.f32 0.0, %v156
  %v158 = vpop.f32.mrf.mxu0
  %v159 = vadd.f32 0.0, %v158
  %v160 = vpop.f32.mrf.mxu0
  %v161 = vadd.f32 0.0, %v160
  %162 = vmatprep.mubr.bf16.mxu0 0
  %163 = vmatmul.mubr.bf16.gmra.mxu0 %v100
  %v164 = vpop.f32.mrf.mxu0
  %v165 = vadd.f32 0.0, %v164
  %v166 = vpop.f32.mrf.mxu0
  %v167 = vadd.f32 0.0, %v166
  %v168 = vpop.f32.mrf.mxu0
  %v169 = vadd.f32 0.0, %v168
  %v170 = vpop.f32.mrf.mxu0
  %v171 = vadd.f32 0.0, %v170
  %172 = vmatprep.mubr.bf16.mxu0 0
  %173 = vmatmul.mubr.bf16.gmra.mxu0 %v103
  %v174 = vpop.f32.mrf.mxu0
  %v175 = vadd.f32 0.0, %v174
  %v176 = vpop.f32.mrf.mxu0
  %v177 = vadd.f32 0.0, %v176
  %v178 = vpop.f32.mrf.mxu0
  %v179 = vadd.f32 0.0, %v178
  %v180 = vpop.f32.mrf.mxu0
  %v181 = vadd.f32 0.0, %v180
  %182 = vmatprep.mubr.bf16.mxu0 0
  %183 = vmatmul.mubr.bf16.gmra.mxu0 %v106
  %v184 = vpop.f32.mrf.mxu0
  %v185 = vadd.f32 0.0, %v184
  %v186 = vpop.f32.mrf.mxu0
  %v187 = vadd.f32 0.0, %v186
  %v188 = vpop.f32.mrf.mxu0
  %v189 = vadd.f32 0.0, %v188
  %v190 = vpop.f32.mrf.mxu0
  %v191 = vadd.f32 0.0, %v190
  %192 = vmatprep.mubr.bf16.mxu0 0
  %193 = vmatmul.mubr.bf16.gmra.mxu0 %v109
  %v194 = vpop.f32.mrf.mxu0
  %v195 = vadd.f32 0.0, %v194
  %v196 = vpop.f32.mrf.mxu0
  %v197 = vadd.f32 0.0, %v196
  %v198 = vpop.f32.mrf.mxu0
  %v199 = vadd.f32 0.0, %v198
  %v200 = vpop.f32.mrf.mxu0
  %v201 = vadd.f32 0.0, %v200
  %202 = vmatprep.mubr.bf16.mxu0 0
  %203 = vmatmul.mubr.bf16.gmra.mxu0 %v112
  %v204 = vpop.f32.mrf.mxu0
  %v205 = vadd.f32 0.0, %v204
  %v206 = vpop.f32.mrf.mxu0
  %v207 = vadd.f32 0.0, %v206
  %v208 = vpop.f32.mrf.mxu0
  %v209 = vadd.f32 0.0, %v208
  %v210 = vpop.f32.mrf.mxu0
  %v211 = vadd.f32 0.0, %v210
  %212 = vmatprep.mubr.bf16.mxu0 0
  %213 = vmatmul.mubr.bf16.gmra.mxu0 %v115
  %v214 = vpop.f32.mrf.mxu0
  %v215 = vadd.f32 0.0, %v214
  %v216 = vpop.f32.mrf.mxu0
  %v217 = vadd.f32 0.0, %v216
  %v218 = vpop.f32.mrf.mxu0
  %v219 = vadd.f32 0.0, %v218
  %v220 = vpop.f32.mrf.mxu0
  %v221 = vadd.f32 0.0, %v220
  %222 = vmatprep.mubr.bf16.mxu0 0
  %223 = vmatmul.mubr.bf16.gmra.mxu0 %v118
  %v224 = vpop.f32.mrf.mxu0
  %v225 = vadd.f32 0.0, %v224
  %v226 = vpop.f32.mrf.mxu0
  %v227 = vadd.f32 0.0, %v226
  %v228 = vpop.f32.mrf.mxu0
  %v229 = vadd.f32 0.0, %v228
  %v230 = vpop.f32.mrf.mxu0
  %v231 = vadd.f32 0.0, %v230
  %232 = vdwg.mxu0
  %v233 = vpack.c.bf16 %v161, %v157
  %v234 = vpack.c.bf16 %v171, %v167
  %v235 = vpack.c.bf16 %v181, %v177
  %v236 = vpack.c.bf16 %v191, %v187
  %v237 = vpack.c.bf16 %v201, %v197
  %v238 = vpack.c.bf16 %v211, %v207
  %v239 = vpack.c.bf16 %v221, %v217
  %v240 = vpack.c.bf16 %v231, %v227
  %v241 = vpack.c.bf16 %v159, %v155
  %v242 = vpack.c.bf16 %v169, %v165
  %v243 = vpack.c.bf16 %v179, %v175
  %v244 = vpack.c.bf16 %v189, %v185
  %v245 = vpack.c.bf16 %v199, %v195
  %v246 = vpack.c.bf16 %v209, %v205
  %v247 = vpack.c.bf16 %v219, %v215
  %v248 = vpack.c.bf16 %v229, %v225
  %257 = vrot.lane.b32.xlu0 %v241, 64
  %v258 = vpop.permute.xlu0 %257
  %259 = vrot.lane.b32.xlu0 %v242, 64
  %v260 = vpop.permute.xlu0 %259
  %261 = vrot.lane.b32.xlu0 %v243, 64
  %v262 = vpop.permute.xlu0 %261
  %263 = vrot.lane.b32.xlu0 %v244, 64
  %v264 = vpop.permute.xlu0 %263
  %265 = vrot.lane.b32.xlu0 %v245, 64
  %v266 = vpop.permute.xlu0 %265
  %267 = vrot.lane.b32.xlu0 %v246, 64
  %v268 = vpop.permute.xlu0 %267
  %269 = vrot.lane.b32.xlu0 %v247, 64
  %v270 = vpop.permute.xlu0 %269
  %271 = vrot.lane.b32.xlu0 %v248, 64
  %v272 = vpop.permute.xlu0 %271
  %vm273 = vcmask 130048
  %v275 = vsel %vm273, %v241, 0
  %v278 = vsel %vm273, %v242, 0
  %v281 = vsel %vm273, %v243, 0
  %v284 = vsel %vm273, %v244, 0
  %v287 = vsel %vm273, %v245, 0
  %v290 = vsel %vm273, %v246, 0
  %v293 = vsel %vm273, %v247, 0
  %v296 = vsel %vm273, %v248, 0
  %v299 = vsel %vm273, %v258, 0
  %v302 = vsel %vm273, %v260, 0
  %v305 = vsel %vm273, %v262, 0
  %v308 = vsel %vm273, %v264, 0
  %v311 = vsel %vm273, %v266, 0
  %v314 = vsel %vm273, %v268, 0
  %v317 = vsel %vm273, %v270, 0
  %v320 = vsel %vm273, %v272, 0
  %322 = vmatprep.subr.bf16.mxu0 0
  %323 = vmatpush1.bf16.xpose.msra.mxu0 %v320
  %324 = vmatprep.subr.bf16.mxu0 0
  %325 = vmatpush1.bf16.xpose.msra.mxu0 %v317
  %326 = vmatprep.subr.bf16.mxu0 0
  %327 = vmatpush1.bf16.xpose.msra.mxu0 %v314
  %328 = vmatprep.subr.bf16.mxu0 0
  %329 = vmatpush1.bf16.xpose.msra.mxu0 %v311
  %330 = vmatprep.subr.bf16.mxu0 0
  %331 = vmatpush1.bf16.xpose.msra.mxu0 %v308
  %332 = vmatprep.subr.bf16.mxu0 0
  %333 = vmatpush1.bf16.xpose.msra.mxu0 %v305
  %334 = vmatprep.subr.bf16.mxu0 0
  %335 = vmatpush1.bf16.xpose.msra.mxu0 %v302
  %336 = vmatprep.subr.bf16.mxu0 0
  %337 = vmatpush1.bf16.xpose.msra.mxu0 %v299
  %338 = vmatprep.subr.bf16.mxu0 0
  %339 = vmatpush2.bf16.xpose.msra.mxu0 0
  %340 = vmatprep.subr.bf16.mxu0 0
  %341 = vmatpush2.bf16.xpose.msra.mxu0 0
  %342 = vmatprep.subr.bf16.mxu0 0
  %343 = vmatpush2.bf16.xpose.msra.mxu0 0
  %344 = vmatprep.subr.bf16.mxu0 0
  %345 = vmatpush2.bf16.xpose.msra.mxu0 0
  %346 = vmatprep.subr.bf16.mxu0 0
  %347 = vmatpush2.bf16.xpose.msra.mxu0 0
  %348 = vmatprep.subr.bf16.mxu0 0
  %349 = vmatpush2.bf16.xpose.msra.mxu0 0
  %350 = vmatprep.subr.bf16.mxu0 0
  %351 = vmatpush2.bf16.xpose.msra.mxu0 0
  %352 = vmatprep.subr.bf16.mxu0 0
  %353 = vmatpush2.bf16.xpose.msra.mxu0 0
  %354 = vmatprep.mubr.bf16.mxu0 0
  %355 = vmatmul.mubr.bf16.gmra.mxu0 %v275
  %v356 = vpop.f32.mrf.mxu0
  %v357 = vadd.f32 0.0, %v356
  %v358 = vpop.f32.mrf.mxu0
  %v359 = vpop.f32.mrf.mxu0
  %v360 = vadd.f32 0.0, %v359
  %v361 = vpop.f32.mrf.mxu0
  %362 = vmatprep.mubr.bf16.mxu0 0
  %363 = vmatmul.mubr.bf16.gmra.mxu0 %v278
  %v364 = vpop.f32.mrf.mxu0
  %v365 = vadd.f32 0.0, %v364
  %v366 = vpop.f32.mrf.mxu0
  %v367 = vpop.f32.mrf.mxu0
  %v368 = vadd.f32 0.0, %v367
  %v369 = vpop.f32.mrf.mxu0
  %370 = vmatprep.mubr.bf16.mxu0 0
  %371 = vmatmul.mubr.bf16.gmra.mxu0 %v281
  %v372 = vpop.f32.mrf.mxu0
  %v373 = vadd.f32 0.0, %v372
  %v374 = vpop.f32.mrf.mxu0
  %v375 = vpop.f32.mrf.mxu0
  %v376 = vadd.f32 0.0, %v375
  %v377 = vpop.f32.mrf.mxu0
  %378 = vmatprep.mubr.bf16.mxu0 0
  %379 = vmatmul.mubr.bf16.gmra.mxu0 %v284
  %v380 = vpop.f32.mrf.mxu0
  %v381 = vadd.f32 0.0, %v380
  %v382 = vpop.f32.mrf.mxu0
  %v383 = vpop.f32.mrf.mxu0
  %v384 = vadd.f32 0.0, %v383
  %v385 = vpop.f32.mrf.mxu0
  %386 = vmatprep.mubr.bf16.mxu0 0
  %387 = vmatmul.mubr.bf16.gmra.mxu0 %v287
  %v388 = vpop.f32.mrf.mxu0
  %v389 = vadd.f32 0.0, %v388
  %v390 = vpop.f32.mrf.mxu0
  %v391 = vpop.f32.mrf.mxu0
  %v392 = vadd.f32 0.0, %v391
  %v393 = vpop.f32.mrf.mxu0
  %394 = vmatprep.mubr.bf16.mxu0 0
  %395 = vmatmul.mubr.bf16.gmra.mxu0 %v290
  %v396 = vpop.f32.mrf.mxu0
  %v397 = vadd.f32 0.0, %v396
  %v398 = vpop.f32.mrf.mxu0
  %v399 = vpop.f32.mrf.mxu0
  %v400 = vadd.f32 0.0, %v399
  %v401 = vpop.f32.mrf.mxu0
  %402 = vmatprep.mubr.bf16.mxu0 0
  %403 = vmatmul.mubr.bf16.gmra.mxu0 %v293
  %v404 = vpop.f32.mrf.mxu0
  %v405 = vadd.f32 0.0, %v404
  %v406 = vpop.f32.mrf.mxu0
  %v407 = vpop.f32.mrf.mxu0
  %v408 = vadd.f32 0.0, %v407
  %v409 = vpop.f32.mrf.mxu0
  %410 = vmatprep.mubr.bf16.mxu0 0
  %411 = vmatmul.mubr.bf16.gmra.mxu0 %v296
  %v412 = vpop.f32.mrf.mxu0
  %v413 = vadd.f32 0.0, %v412
  %v414 = vpop.f32.mrf.mxu0
  %v415 = vpop.f32.mrf.mxu0
  %v416 = vadd.f32 0.0, %v415
  %v417 = vpop.f32.mrf.mxu0
  %418 = vdwg.mxu0
  %v419 = vmax.f32 %v357, -10.0
  %v420 = vmax.f32 %v360, -10.0
  %v421 = vmax.f32 %v365, -10.0
  %v422 = vmax.f32 %v368, -10.0
  %v423 = vmax.f32 %v373, -10.0
  %v424 = vmax.f32 %v376, -10.0
  %v425 = vmax.f32 %v381, -10.0
  %v426 = vmax.f32 %v384, -10.0
  %v427 = vmax.f32 %v389, -10.0
  %v428 = vmax.f32 %v392, -10.0
  %v429 = vmax.f32 %v397, -10.0
  %v430 = vmax.f32 %v400, -10.0
  %v431 = vmax.f32 %v405, -10.0
  %v432 = vmax.f32 %v408, -10.0
  %v433 = vmax.f32 %v413, -10.0
  %v434 = vmax.f32 %v416, -10.0
  %v435 = vmin.f32 %v419, 10.0
  %v436 = vmin.f32 %v420, 10.0
  %v437 = vmin.f32 %v421, 10.0
  %v438 = vmin.f32 %v422, 10.0
  %v439 = vmin.f32 %v423, 10.0
  %v440 = vmin.f32 %v424, 10.0
  %v441 = vmin.f32 %v425, 10.0
  %v442 = vmin.f32 %v426, 10.0
  %v443 = vmin.f32 %v427, 10.0
  %v444 = vmin.f32 %v428, 10.0
  %v445 = vmin.f32 %v429, 10.0
  %v446 = vmin.f32 %v430, 10.0
  %v447 = vmin.f32 %v431, 10.0
  %v448 = vmin.f32 %v432, 10.0
  %v449 = vmin.f32 %v433, 10.0
  %v450 = vmin.f32 %v434, 10.0
  %v451 = vmul.f32 %v435, 1.442695
  %v452 = vpow.pop %v451
  %v453 = vmul.f32 %v436, 1.442695
  %v454 = vpow.pop %v453
  %v455 = vmul.f32 %v437, 1.442695
  %v456 = vpow.pop %v455
  %v457 = vmul.f32 %v438, 1.442695
  %v458 = vpow.pop %v457
  %v459 = vmul.f32 %v439, 1.442695
  %v460 = vpow.pop %v459
  %v461 = vmul.f32 %v440, 1.442695
  %v462 = vpow.pop %v461
  %v463 = vmul.f32 %v441, 1.442695
  %v464 = vpow.pop %v463
  %v465 = vmul.f32 %v442, 1.442695
  %v466 = vpow.pop %v465
  %v467 = vmul.f32 %v443, 1.442695
  %v468 = vpow.pop %v467
  %v469 = vmul.f32 %v444, 1.442695
  %v470 = vpow.pop %v469
  %v471 = vmul.f32 %v445, 1.442695
  %v472 = vpow.pop %v471
  %v473 = vmul.f32 %v446, 1.442695
  %v474 = vpow.pop %v473
  %v475 = vmul.f32 %v447, 1.442695
  %v476 = vpow.pop %v475
  %v477 = vmul.f32 %v448, 1.442695
  %v478 = vpow.pop %v477
  %v479 = vmul.f32 %v449, 1.442695
  %v480 = vpow.pop %v479
  %v481 = vmul.f32 %v450, 1.442695
  %v482 = vpow.pop %v481
  %v483 = vmul.f32 %v452, %v31
  %v484 = vmul.f32 %v454, %v32
  %v485 = vmul.f32 %v456, %v33
  %v486 = vmul.f32 %v458, %v34
  %v487 = vmul.f32 %v460, %v35
  %v488 = vmul.f32 %v462, %v36
  %v489 = vmul.f32 %v464, %v37
  %v490 = vmul.f32 %v466, %v38
  %v491 = vmul.f32 %v468, %v39
  %v492 = vmul.f32 %v470, %v40
  %v493 = vmul.f32 %v472, %v41
  %v494 = vmul.f32 %v474, %v42
  %v495 = vmul.f32 %v476, %v43
  %v496 = vmul.f32 %v478, %v44
  %v497 = vmul.f32 %v480, %v45
  %v498 = vmul.f32 %v482, %v46
  %499 = vadd.xlane.f32.xlu0 %v483
  %v500 = vpop.xlane.xlu0 %499
  %501 = vadd.xlane.f32.xlu0 %v484
  %v502 = vpop.xlane.xlu0 %501
  %503 = vadd.xlane.f32.xlu0 %v485
  %v504 = vpop.xlane.xlu0 %503
  %505 = vadd.xlane.f32.xlu0 %v486
  %v506 = vpop.xlane.xlu0 %505
  %507 = vadd.xlane.f32.xlu0 %v487
  %v508 = vpop.xlane.xlu0 %507
  %509 = vadd.xlane.f32.xlu0 %v488
  %v510 = vpop.xlane.xlu0 %509
  %511 = vadd.xlane.f32.xlu0 %v489
  %v512 = vpop.xlane.xlu0 %511
  %513 = vadd.xlane.f32.xlu0 %v490
  %v514 = vpop.xlane.xlu0 %513
  %515 = vadd.xlane.f32.xlu0 %v491
  %v516 = vpop.xlane.xlu0 %515
  %517 = vadd.xlane.f32.xlu0 %v492
  %v518 = vpop.xlane.xlu0 %517
  %519 = vadd.xlane.f32.xlu0 %v493
  %v520 = vpop.xlane.xlu0 %519
  %521 = vadd.xlane.f32.xlu0 %v494
  %v522 = vpop.xlane.xlu0 %521
  %523 = vadd.xlane.f32.xlu0 %v495
  %v524 = vpop.xlane.xlu0 %523
  %525 = vadd.xlane.f32.xlu0 %v496
  %v526 = vpop.xlane.xlu0 %525
  %527 = vadd.xlane.f32.xlu0 %v497
  %v528 = vpop.xlane.xlu0 %527
  %529 = vadd.xlane.f32.xlu0 %v498
  %v530 = vpop.xlane.xlu0 %529
  %v531 = vadd.f32 %v500, 1e-08
  %v532 = vadd.f32 %v502, 1e-08
  %v533 = vadd.f32 %v504, 1e-08
  %v534 = vadd.f32 %v506, 1e-08
  %v535 = vadd.f32 %v508, 1e-08
  %v536 = vadd.f32 %v510, 1e-08
  %v537 = vadd.f32 %v512, 1e-08
  %v538 = vadd.f32 %v514, 1e-08
  %v539 = vadd.f32 %v516, 1e-08
  %v540 = vadd.f32 %v518, 1e-08
  %v541 = vadd.f32 %v520, 1e-08
  %v542 = vadd.f32 %v522, 1e-08
  %v543 = vadd.f32 %v524, 1e-08
  %v544 = vadd.f32 %v526, 1e-08
  %v545 = vadd.f32 %v528, 1e-08
  %v546 = vadd.f32 %v530, 1e-08
  %v547 = vpack.c.bf16 %v484, %v483
  %v548 = vpack.c.bf16 %v486, %v485
  %v549 = vpack.c.bf16 %v488, %v487
  %v550 = vpack.c.bf16 %v490, %v489
  %v551 = vpack.c.bf16 %v492, %v491
  %v552 = vpack.c.bf16 %v494, %v493
  %v553 = vpack.c.bf16 %v496, %v495
  %v554 = vpack.c.bf16 %v498, %v497
  %555 = vmatprep.subr.bf16.mxu0 0
  %556 = vmatpush1.bf16.msra.mxu0 %v240
  %557 = vmatprep.subr.bf16.mxu0 0
  %558 = vmatpush1.bf16.msra.mxu0 %v239
  %559 = vmatprep.subr.bf16.mxu0 0
  %560 = vmatpush1.bf16.msra.mxu0 %v238
  %561 = vmatprep.subr.bf16.mxu0 0
  %562 = vmatpush1.bf16.msra.mxu0 %v237
  %563 = vmatprep.subr.bf16.mxu0 0
  %564 = vmatpush1.bf16.msra.mxu0 %v236
  %565 = vmatprep.subr.bf16.mxu0 0
  %566 = vmatpush1.bf16.msra.mxu0 %v235
  %567 = vmatprep.subr.bf16.mxu0 0
  %568 = vmatpush1.bf16.msra.mxu0 %v234
  %569 = vmatprep.subr.bf16.mxu0 0
  %570 = vmatpush1.bf16.msra.mxu0 %v233
  %571 = vmatprep.subr.bf16.mxu0 0
  %572 = vmatpush2.bf16.msra.mxu0 0
  %573 = vmatprep.subr.bf16.mxu0 0
  %574 = vmatpush2.bf16.msra.mxu0 0
  %575 = vmatprep.subr.bf16.mxu0 0
  %576 = vmatpush2.bf16.msra.mxu0 0
  %577 = vmatprep.subr.bf16.mxu0 0
  %578 = vmatpush2.bf16.msra.mxu0 0
  %579 = vmatprep.subr.bf16.mxu0 0
  %580 = vmatpush2.bf16.msra.mxu0 0
  %581 = vmatprep.subr.bf16.mxu0 0
  %582 = vmatpush2.bf16.msra.mxu0 0
  %583 = vmatprep.subr.bf16.mxu0 0
  %584 = vmatpush2.bf16.msra.mxu0 0
  %585 = vmatprep.subr.bf16.mxu0 0
  %586 = vmatpush2.bf16.msra.mxu0 0
  %587 = vmatprep.mubr.bf16.mxu0 0
  %588 = vmatmul.mubr.bf16.gmra.mxu0 %v547
  %v589 = vpop.f32.mrf.mxu0
  %v590 = vadd.f32 0.0, %v589
  %v591 = vpop.f32.mrf.mxu0
  %v592 = vpop.f32.mrf.mxu0
  %v593 = vadd.f32 0.0, %v592
  %v594 = vpop.f32.mrf.mxu0
  %595 = vmatprep.mubr.bf16.mxu0 0
  %596 = vmatmul.mubr.bf16.gmra.mxu0 %v548
  %v597 = vpop.f32.mrf.mxu0
  %v598 = vadd.f32 0.0, %v597
  %v599 = vpop.f32.mrf.mxu0
  %v600 = vpop.f32.mrf.mxu0
  %v601 = vadd.f32 0.0, %v600
  %v602 = vpop.f32.mrf.mxu0
  %603 = vmatprep.mubr.bf16.mxu0 0
  %604 = vmatmul.mubr.bf16.gmra.mxu0 %v549
  %v605 = vpop.f32.mrf.mxu0
  %v606 = vadd.f32 0.0, %v605
  %v607 = vpop.f32.mrf.mxu0
  %v608 = vpop.f32.mrf.mxu0
  %v609 = vadd.f32 0.0, %v608
  %v610 = vpop.f32.mrf.mxu0
  %611 = vmatprep.mubr.bf16.mxu0 0
  %612 = vmatmul.mubr.bf16.gmra.mxu0 %v550
  %v613 = vpop.f32.mrf.mxu0
  %v614 = vadd.f32 0.0, %v613
  %v615 = vpop.f32.mrf.mxu0
  %v616 = vpop.f32.mrf.mxu0
  %v617 = vadd.f32 0.0, %v616
  %v618 = vpop.f32.mrf.mxu0
  %619 = vmatprep.mubr.bf16.mxu0 0
  %620 = vmatmul.mubr.bf16.gmra.mxu0 %v551
  %v621 = vpop.f32.mrf.mxu0
  %v622 = vadd.f32 0.0, %v621
  %v623 = vpop.f32.mrf.mxu0
  %v624 = vpop.f32.mrf.mxu0
  %v625 = vadd.f32 0.0, %v624
  %v626 = vpop.f32.mrf.mxu0
  %627 = vmatprep.mubr.bf16.mxu0 0
  %628 = vmatmul.mubr.bf16.gmra.mxu0 %v552
  %v629 = vpop.f32.mrf.mxu0
  %v630 = vadd.f32 0.0, %v629
  %v631 = vpop.f32.mrf.mxu0
  %v632 = vpop.f32.mrf.mxu0
  %v633 = vadd.f32 0.0, %v632
  %v634 = vpop.f32.mrf.mxu0
  %635 = vmatprep.mubr.bf16.mxu0 0
  %636 = vmatmul.mubr.bf16.gmra.mxu0 %v553
  %v637 = vpop.f32.mrf.mxu0
  %v638 = vadd.f32 0.0, %v637
  %v639 = vpop.f32.mrf.mxu0
  %v640 = vpop.f32.mrf.mxu0
  %v641 = vadd.f32 0.0, %v640
  %v642 = vpop.f32.mrf.mxu0
  %643 = vmatprep.mubr.bf16.mxu0 0
  %644 = vmatmul.mubr.bf16.gmra.mxu0 %v554
  %v645 = vpop.f32.mrf.mxu0
  %v646 = vadd.f32 0.0, %v645
  %v647 = vpop.f32.mrf.mxu0
  %v648 = vpop.f32.mrf.mxu0
  %v649 = vadd.f32 0.0, %v648
  %v650 = vpop.f32.mrf.mxu0
  %651 = vdwg.mxu0
  %v652 = vrcp.pop %v531
  %v653 = vrcp.pop %v532
  %v654 = vrcp.pop %v533
  %v655 = vrcp.pop %v534
  %v656 = vrcp.pop %v535
  %v657 = vrcp.pop %v536
  %v658 = vrcp.pop %v537
  %v659 = vrcp.pop %v538
  %v660 = vrcp.pop %v539
  %v661 = vrcp.pop %v540
  %v662 = vrcp.pop %v541
  %v663 = vrcp.pop %v542
  %v664 = vrcp.pop %v543
  %v665 = vrcp.pop %v544
  %v666 = vrcp.pop %v545
  %v667 = vrcp.pop %v546
  %v668 = vmul.f32 %v590, %v652
  %v669 = vmul.f32 %v593, %v653
  %v670 = vmul.f32 %v598, %v654
  %v671 = vmul.f32 %v601, %v655
  %v672 = vmul.f32 %v606, %v656
  %v673 = vmul.f32 %v609, %v657
  %v674 = vmul.f32 %v614, %v658
  %v675 = vmul.f32 %v617, %v659
  %v676 = vmul.f32 %v622, %v660
  %v677 = vmul.f32 %v625, %v661
  %v678 = vmul.f32 %v630, %v662
  %v679 = vmul.f32 %v633, %v663
  %v680 = vmul.f32 %v638, %v664
  %v681 = vmul.f32 %v641, %v665
  %v682 = vmul.f32 %v646, %v666
  %v683 = vmul.f32 %v649, %v667
  %684 = vrot.lane.b32.xlu0 %v241, 112
  %v685 = vpop.permute.xlu0 %684
  %686 = vrot.lane.b32.xlu0 %v242, 112
  %v687 = vpop.permute.xlu0 %686
  %688 = vrot.lane.b32.xlu0 %v243, 112
  %v689 = vpop.permute.xlu0 %688
  %690 = vrot.lane.b32.xlu0 %v244, 112
  %v691 = vpop.permute.xlu0 %690
  %692 = vrot.lane.b32.xlu0 %v245, 112
  %v693 = vpop.permute.xlu0 %692
  %694 = vrot.lane.b32.xlu0 %v246, 112
  %v695 = vpop.permute.xlu0 %694
  %696 = vrot.lane.b32.xlu0 %v247, 112
  %v697 = vpop.permute.xlu0 %696
  %698 = vrot.lane.b32.xlu0 %v248, 112
  %v699 = vpop.permute.xlu0 %698
  %700 = vrot.lane.b32.xlu0 %v241, 48
  %v701 = vpop.permute.xlu0 %700
  %702 = vrot.lane.b32.xlu0 %v242, 48
  %v703 = vpop.permute.xlu0 %702
  %704 = vrot.lane.b32.xlu0 %v243, 48
  %v705 = vpop.permute.xlu0 %704
  %706 = vrot.lane.b32.xlu0 %v244, 48
  %v707 = vpop.permute.xlu0 %706
  %708 = vrot.lane.b32.xlu0 %v245, 48
  %v709 = vpop.permute.xlu0 %708
  %710 = vrot.lane.b32.xlu0 %v246, 48
  %v711 = vpop.permute.xlu0 %710
  %712 = vrot.lane.b32.xlu0 %v247, 48
  %v713 = vpop.permute.xlu0 %712
  %714 = vrot.lane.b32.xlu0 %v248, 48
  %v715 = vpop.permute.xlu0 %714
  %v717 = vsel %vm273, %v685, 0
  %v720 = vsel %vm273, %v687, 0
  %v723 = vsel %vm273, %v689, 0
  %v726 = vsel %vm273, %v691, 0
  %v729 = vsel %vm273, %v693, 0
  %v732 = vsel %vm273, %v695, 0
  %v735 = vsel %vm273, %v697, 0
  %v738 = vsel %vm273, %v699, 0
  %v741 = vsel %vm273, %v701, 0
  %v744 = vsel %vm273, %v703, 0
  %v747 = vsel %vm273, %v705, 0
  %v750 = vsel %vm273, %v707, 0
  %v753 = vsel %vm273, %v709, 0
  %v756 = vsel %vm273, %v711, 0
  %v759 = vsel %vm273, %v713, 0
  %v762 = vsel %vm273, %v715, 0
  %764 = vmatprep.subr.bf16.mxu0 0
  %765 = vmatpush1.bf16.xpose.msra.mxu0 %v762
  %766 = vmatprep.subr.bf16.mxu0 0
  %767 = vmatpush1.bf16.xpose.msra.mxu0 %v759
  %768 = vmatprep.subr.bf16.mxu0 0
  %769 = vmatpush1.bf16.xpose.msra.mxu0 %v756
  %770 = vmatprep.subr.bf16.mxu0 0
  %771 = vmatpush1.bf16.xpose.msra.mxu0 %v753
  %772 = vmatprep.subr.bf16.mxu0 0
  %773 = vmatpush1.bf16.xpose.msra.mxu0 %v750
  %774 = vmatprep.subr.bf16.mxu0 0
  %775 = vmatpush1.bf16.xpose.msra.mxu0 %v747
  %776 = vmatprep.subr.bf16.mxu0 0
  %777 = vmatpush1.bf16.xpose.msra.mxu0 %v744
  %778 = vmatprep.subr.bf16.mxu0 0
  %779 = vmatpush1.bf16.xpose.msra.mxu0 %v741
  %780 = vmatprep.subr.bf16.mxu0 0
  %781 = vmatpush2.bf16.xpose.msra.mxu0 0
  %782 = vmatprep.subr.bf16.mxu0 0
  %783 = vmatpush2.bf16.xpose.msra.mxu0 0
  %784 = vmatprep.subr.bf16.mxu0 0
  %785 = vmatpush2.bf16.xpose.msra.mxu0 0
  %786 = vmatprep.subr.bf16.mxu0 0
  %787 = vmatpush2.bf16.xpose.msra.mxu0 0
  %788 = vmatprep.subr.bf16.mxu0 0
  %789 = vmatpush2.bf16.xpose.msra.mxu0 0
  %790 = vmatprep.subr.bf16.mxu0 0
  %791 = vmatpush2.bf16.xpose.msra.mxu0 0
  %792 = vmatprep.subr.bf16.mxu0 0
  %793 = vmatpush2.bf16.xpose.msra.mxu0 0
  %794 = vmatprep.subr.bf16.mxu0 0
  %795 = vmatpush2.bf16.xpose.msra.mxu0 0
  %796 = vmatprep.mubr.bf16.mxu0 0
  %797 = vmatmul.mubr.bf16.gmra.mxu0 %v717
  %v798 = vpop.f32.mrf.mxu0
  %v799 = vadd.f32 0.0, %v798
  %v800 = vpop.f32.mrf.mxu0
  %v801 = vpop.f32.mrf.mxu0
  %v802 = vadd.f32 0.0, %v801
  %v803 = vpop.f32.mrf.mxu0
  %804 = vmatprep.mubr.bf16.mxu0 0
  %805 = vmatmul.mubr.bf16.gmra.mxu0 %v720
  %v806 = vpop.f32.mrf.mxu0
  %v807 = vadd.f32 0.0, %v806
  %v808 = vpop.f32.mrf.mxu0
  %v809 = vpop.f32.mrf.mxu0
  %v810 = vadd.f32 0.0, %v809
  %v811 = vpop.f32.mrf.mxu0
  %812 = vmatprep.mubr.bf16.mxu0 0
  %813 = vmatmul.mubr.bf16.gmra.mxu0 %v723
  %v814 = vpop.f32.mrf.mxu0
  %v815 = vadd.f32 0.0, %v814
  %v816 = vpop.f32.mrf.mxu0
  %v817 = vpop.f32.mrf.mxu0
  %v818 = vadd.f32 0.0, %v817
  %v819 = vpop.f32.mrf.mxu0
  %820 = vmatprep.mubr.bf16.mxu0 0
  %821 = vmatmul.mubr.bf16.gmra.mxu0 %v726
  %v822 = vpop.f32.mrf.mxu0
  %v823 = vadd.f32 0.0, %v822
  %v824 = vpop.f32.mrf.mxu0
  %v825 = vpop.f32.mrf.mxu0
  %v826 = vadd.f32 0.0, %v825
  %v827 = vpop.f32.mrf.mxu0
  %828 = vmatprep.mubr.bf16.mxu0 0
  %829 = vmatmul.mubr.bf16.gmra.mxu0 %v729
  %v830 = vpop.f32.mrf.mxu0
  %v831 = vadd.f32 0.0, %v830
  %v832 = vpop.f32.mrf.mxu0
  %v833 = vpop.f32.mrf.mxu0
  %v834 = vadd.f32 0.0, %v833
  %v835 = vpop.f32.mrf.mxu0
  %836 = vmatprep.mubr.bf16.mxu0 0
  %837 = vmatmul.mubr.bf16.gmra.mxu0 %v732
  %v838 = vpop.f32.mrf.mxu0
  %v839 = vadd.f32 0.0, %v838
  %v840 = vpop.f32.mrf.mxu0
  %v841 = vpop.f32.mrf.mxu0
  %v842 = vadd.f32 0.0, %v841
  %v843 = vpop.f32.mrf.mxu0
  %844 = vmatprep.mubr.bf16.mxu0 0
  %845 = vmatmul.mubr.bf16.gmra.mxu0 %v735
  %v846 = vpop.f32.mrf.mxu0
  %v847 = vadd.f32 0.0, %v846
  %v848 = vpop.f32.mrf.mxu0
  %v849 = vpop.f32.mrf.mxu0
  %v850 = vadd.f32 0.0, %v849
  %v851 = vpop.f32.mrf.mxu0
  %852 = vmatprep.mubr.bf16.mxu0 0
  %853 = vmatmul.mubr.bf16.gmra.mxu0 %v738
  %v854 = vpop.f32.mrf.mxu0
  %v855 = vadd.f32 0.0, %v854
  %v856 = vpop.f32.mrf.mxu0
  %v857 = vpop.f32.mrf.mxu0
  %v858 = vadd.f32 0.0, %v857
  %v859 = vpop.f32.mrf.mxu0
  %860 = vdwg.mxu0
  %v861 = vmax.f32 %v799, -10.0
  %v862 = vmax.f32 %v802, -10.0
  %v863 = vmax.f32 %v807, -10.0
  %v864 = vmax.f32 %v810, -10.0
  %v865 = vmax.f32 %v815, -10.0
  %v866 = vmax.f32 %v818, -10.0
  %v867 = vmax.f32 %v823, -10.0
  %v868 = vmax.f32 %v826, -10.0
  %v869 = vmax.f32 %v831, -10.0
  %v870 = vmax.f32 %v834, -10.0
  %v871 = vmax.f32 %v839, -10.0
  %v872 = vmax.f32 %v842, -10.0
  %v873 = vmax.f32 %v847, -10.0
  %v874 = vmax.f32 %v850, -10.0
  %v875 = vmax.f32 %v855, -10.0
  %v876 = vmax.f32 %v858, -10.0
  %v877 = vmin.f32 %v861, 10.0
  %v878 = vmin.f32 %v862, 10.0
  %v879 = vmin.f32 %v863, 10.0
  %v880 = vmin.f32 %v864, 10.0
  %v881 = vmin.f32 %v865, 10.0
  %v882 = vmin.f32 %v866, 10.0
  %v883 = vmin.f32 %v867, 10.0
  %v884 = vmin.f32 %v868, 10.0
  %v885 = vmin.f32 %v869, 10.0
  %v886 = vmin.f32 %v870, 10.0
  %v887 = vmin.f32 %v871, 10.0
  %v888 = vmin.f32 %v872, 10.0
  %v889 = vmin.f32 %v873, 10.0
  %v890 = vmin.f32 %v874, 10.0
  %v891 = vmin.f32 %v875, 10.0
  %v892 = vmin.f32 %v876, 10.0
  %v893 = vmul.f32 %v877, 1.442695
  %v894 = vpow.pop %v893
  %v895 = vmul.f32 %v878, 1.442695
  %v896 = vpow.pop %v895
  %v897 = vmul.f32 %v879, 1.442695
  %v898 = vpow.pop %v897
  %v899 = vmul.f32 %v880, 1.442695
  %v900 = vpow.pop %v899
  %v901 = vmul.f32 %v881, 1.442695
  %v902 = vpow.pop %v901
  %v903 = vmul.f32 %v882, 1.442695
  %v904 = vpow.pop %v903
  %v905 = vmul.f32 %v883, 1.442695
  %v906 = vpow.pop %v905
  %v907 = vmul.f32 %v884, 1.442695
  %v908 = vpow.pop %v907
  %v909 = vmul.f32 %v885, 1.442695
  %v910 = vpow.pop %v909
  %v911 = vmul.f32 %v886, 1.442695
  %v912 = vpow.pop %v911
  %v913 = vmul.f32 %v887, 1.442695
  %v914 = vpow.pop %v913
  %v915 = vmul.f32 %v888, 1.442695
  %v916 = vpow.pop %v915
  %v917 = vmul.f32 %v889, 1.442695
  %v918 = vpow.pop %v917
  %v919 = vmul.f32 %v890, 1.442695
  %v920 = vpow.pop %v919
  %v921 = vmul.f32 %v891, 1.442695
  %v922 = vpow.pop %v921
  %v923 = vmul.f32 %v892, 1.442695
  %v924 = vpow.pop %v923
  %v925 = vmul.f32 %v894, %v31
  %v926 = vmul.f32 %v896, %v32
  %v927 = vmul.f32 %v898, %v33
  %v928 = vmul.f32 %v900, %v34
  %v929 = vmul.f32 %v902, %v35
  %v930 = vmul.f32 %v904, %v36
  %v931 = vmul.f32 %v906, %v37
  %v932 = vmul.f32 %v908, %v38
  %v933 = vmul.f32 %v910, %v39
  %v934 = vmul.f32 %v912, %v40
  %v935 = vmul.f32 %v914, %v41
  %v936 = vmul.f32 %v916, %v42
  %v937 = vmul.f32 %v918, %v43
  %v938 = vmul.f32 %v920, %v44
  %v939 = vmul.f32 %v922, %v45
  %v940 = vmul.f32 %v924, %v46
  %941 = vadd.xlane.f32.xlu0 %v925
  %v942 = vpop.xlane.xlu0 %941
  %943 = vadd.xlane.f32.xlu0 %v926
  %v944 = vpop.xlane.xlu0 %943
  %945 = vadd.xlane.f32.xlu0 %v927
  %v946 = vpop.xlane.xlu0 %945
  %947 = vadd.xlane.f32.xlu0 %v928
  %v948 = vpop.xlane.xlu0 %947
  %949 = vadd.xlane.f32.xlu0 %v929
  %v950 = vpop.xlane.xlu0 %949
  %951 = vadd.xlane.f32.xlu0 %v930
  %v952 = vpop.xlane.xlu0 %951
  %953 = vadd.xlane.f32.xlu0 %v931
  %v954 = vpop.xlane.xlu0 %953
  %955 = vadd.xlane.f32.xlu0 %v932
  %v956 = vpop.xlane.xlu0 %955
  %957 = vadd.xlane.f32.xlu0 %v933
  %v958 = vpop.xlane.xlu0 %957
  %959 = vadd.xlane.f32.xlu0 %v934
  %v960 = vpop.xlane.xlu0 %959
  %961 = vadd.xlane.f32.xlu0 %v935
  %v962 = vpop.xlane.xlu0 %961
  %963 = vadd.xlane.f32.xlu0 %v936
  %v964 = vpop.xlane.xlu0 %963
  %965 = vadd.xlane.f32.xlu0 %v937
  %v966 = vpop.xlane.xlu0 %965
  %967 = vadd.xlane.f32.xlu0 %v938
  %v968 = vpop.xlane.xlu0 %967
  %969 = vadd.xlane.f32.xlu0 %v939
  %v970 = vpop.xlane.xlu0 %969
  %971 = vadd.xlane.f32.xlu0 %v940
  %v972 = vpop.xlane.xlu0 %971
  %v973 = vadd.f32 %v942, 1e-08
  %v974 = vadd.f32 %v944, 1e-08
  %v975 = vadd.f32 %v946, 1e-08
  %v976 = vadd.f32 %v948, 1e-08
  %v977 = vadd.f32 %v950, 1e-08
  %v978 = vadd.f32 %v952, 1e-08
  %v979 = vadd.f32 %v954, 1e-08
  %v980 = vadd.f32 %v956, 1e-08
  %v981 = vadd.f32 %v958, 1e-08
  %v982 = vadd.f32 %v960, 1e-08
  %v983 = vadd.f32 %v962, 1e-08
  %v984 = vadd.f32 %v964, 1e-08
  %v985 = vadd.f32 %v966, 1e-08
  %v986 = vadd.f32 %v968, 1e-08
  %v987 = vadd.f32 %v970, 1e-08
  %v988 = vadd.f32 %v972, 1e-08
  %v989 = vpack.c.bf16 %v926, %v925
  %v990 = vpack.c.bf16 %v928, %v927
  %v991 = vpack.c.bf16 %v930, %v929
  %v992 = vpack.c.bf16 %v932, %v931
  %v993 = vpack.c.bf16 %v934, %v933
  %v994 = vpack.c.bf16 %v936, %v935
  %v995 = vpack.c.bf16 %v938, %v937
  %v996 = vpack.c.bf16 %v940, %v939
  %1005 = vrot.lane.b32.xlu0 %v233, 112
  %v1006 = vpop.permute.xlu0 %1005
  %1007 = vrot.lane.b32.xlu0 %v234, 112
  %v1008 = vpop.permute.xlu0 %1007
  %1009 = vrot.lane.b32.xlu0 %v235, 112
  %v1010 = vpop.permute.xlu0 %1009
  %1011 = vrot.lane.b32.xlu0 %v236, 112
  %v1012 = vpop.permute.xlu0 %1011
  %1013 = vrot.lane.b32.xlu0 %v237, 112
  %v1014 = vpop.permute.xlu0 %1013
  %1015 = vrot.lane.b32.xlu0 %v238, 112
  %v1016 = vpop.permute.xlu0 %1015
  %1017 = vrot.lane.b32.xlu0 %v239, 112
  %v1018 = vpop.permute.xlu0 %1017
  %1019 = vrot.lane.b32.xlu0 %v240, 112
  %v1020 = vpop.permute.xlu0 %1019
  %1029 = vmatprep.subr.bf16.mxu0 0
  %1030 = vmatpush1.bf16.msra.mxu0 %v1020
  %1031 = vmatprep.subr.bf16.mxu0 0
  %1032 = vmatpush1.bf16.msra.mxu0 %v1018
  %1033 = vmatprep.subr.bf16.mxu0 0
  %1034 = vmatpush1.bf16.msra.mxu0 %v1016
  %1035 = vmatprep.subr.bf16.mxu0 0
  %1036 = vmatpush1.bf16.msra.mxu0 %v1014
  %1037 = vmatprep.subr.bf16.mxu0 0
  %1038 = vmatpush1.bf16.msra.mxu0 %v1012
  %1039 = vmatprep.subr.bf16.mxu0 0
  %1040 = vmatpush1.bf16.msra.mxu0 %v1010
  %1041 = vmatprep.subr.bf16.mxu0 0
  %1042 = vmatpush1.bf16.msra.mxu0 %v1008
  %1043 = vmatprep.subr.bf16.mxu0 0
  %1044 = vmatpush1.bf16.msra.mxu0 %v1006
  %1045 = vmatprep.subr.bf16.mxu0 0
  %1046 = vmatpush2.bf16.msra.mxu0 0
  %1047 = vmatprep.subr.bf16.mxu0 0
  %1048 = vmatpush2.bf16.msra.mxu0 0
  %1049 = vmatprep.subr.bf16.mxu0 0
  %1050 = vmatpush2.bf16.msra.mxu0 0
  %1051 = vmatprep.subr.bf16.mxu0 0
  %1052 = vmatpush2.bf16.msra.mxu0 0
  %1053 = vmatprep.subr.bf16.mxu0 0
  %1054 = vmatpush2.bf16.msra.mxu0 0
  %1055 = vmatprep.subr.bf16.mxu0 0
  %1056 = vmatpush2.bf16.msra.mxu0 0
  %1057 = vmatprep.subr.bf16.mxu0 0
  %1058 = vmatpush2.bf16.msra.mxu0 0
  %1059 = vmatprep.subr.bf16.mxu0 0
  %1060 = vmatpush2.bf16.msra.mxu0 0
  %1061 = vmatprep.mubr.bf16.mxu0 0
  %1062 = vmatmul.mubr.bf16.gmra.mxu0 %v989
  %v1063 = vpop.f32.mrf.mxu0
  %v1064 = vadd.f32 0.0, %v1063
  %v1065 = vpop.f32.mrf.mxu0
  %v1066 = vpop.f32.mrf.mxu0
  %v1067 = vadd.f32 0.0, %v1066
  %v1068 = vpop.f32.mrf.mxu0
  %1069 = vmatprep.mubr.bf16.mxu0 0
  %1070 = vmatmul.mubr.bf16.gmra.mxu0 %v990
  %v1071 = vpop.f32.mrf.mxu0
  %v1072 = vadd.f32 0.0, %v1071
  %v1073 = vpop.f32.mrf.mxu0
  %v1074 = vpop.f32.mrf.mxu0
  %v1075 = vadd.f32 0.0, %v1074
  %v1076 = vpop.f32.mrf.mxu0
  %1077 = vmatprep.mubr.bf16.mxu0 0
  %1078 = vmatmul.mubr.bf16.gmra.mxu0 %v991
  %v1079 = vpop.f32.mrf.mxu0
  %v1080 = vadd.f32 0.0, %v1079
  %v1081 = vpop.f32.mrf.mxu0
  %v1082 = vpop.f32.mrf.mxu0
  %v1083 = vadd.f32 0.0, %v1082
  %v1084 = vpop.f32.mrf.mxu0
  %1085 = vmatprep.mubr.bf16.mxu0 0
  %1086 = vmatmul.mubr.bf16.gmra.mxu0 %v992
  %v1087 = vpop.f32.mrf.mxu0
  %v1088 = vadd.f32 0.0, %v1087
  %v1089 = vpop.f32.mrf.mxu0
  %v1090 = vpop.f32.mrf.mxu0
  %v1091 = vadd.f32 0.0, %v1090
  %v1092 = vpop.f32.mrf.mxu0
  %1093 = vmatprep.mubr.bf16.mxu0 0
  %1094 = vmatmul.mubr.bf16.gmra.mxu0 %v993
  %v1095 = vpop.f32.mrf.mxu0
  %v1096 = vadd.f32 0.0, %v1095
  %v1097 = vpop.f32.mrf.mxu0
  %v1098 = vpop.f32.mrf.mxu0
  %v1099 = vadd.f32 0.0, %v1098
  %v1100 = vpop.f32.mrf.mxu0
  %1101 = vmatprep.mubr.bf16.mxu0 0
  %1102 = vmatmul.mubr.bf16.gmra.mxu0 %v994
  %v1103 = vpop.f32.mrf.mxu0
  %v1104 = vadd.f32 0.0, %v1103
  %v1105 = vpop.f32.mrf.mxu0
  %v1106 = vpop.f32.mrf.mxu0
  %v1107 = vadd.f32 0.0, %v1106
  %v1108 = vpop.f32.mrf.mxu0
  %1109 = vmatprep.mubr.bf16.mxu0 0
  %1110 = vmatmul.mubr.bf16.gmra.mxu0 %v995
  %v1111 = vpop.f32.mrf.mxu0
  %v1112 = vadd.f32 0.0, %v1111
  %v1113 = vpop.f32.mrf.mxu0
  %v1114 = vpop.f32.mrf.mxu0
  %v1115 = vadd.f32 0.0, %v1114
  %v1116 = vpop.f32.mrf.mxu0
  %1117 = vmatprep.mubr.bf16.mxu0 0
  %1118 = vmatmul.mubr.bf16.gmra.mxu0 %v996
  %v1119 = vpop.f32.mrf.mxu0
  %v1120 = vadd.f32 0.0, %v1119
  %v1121 = vpop.f32.mrf.mxu0
  %v1122 = vpop.f32.mrf.mxu0
  %v1123 = vadd.f32 0.0, %v1122
  %v1124 = vpop.f32.mrf.mxu0
  %1125 = vdwg.mxu0
  %v1126 = vrcp.pop %v973
  %v1127 = vrcp.pop %v974
  %v1128 = vrcp.pop %v975
  %v1129 = vrcp.pop %v976
  %v1130 = vrcp.pop %v977
  %v1131 = vrcp.pop %v978
  %v1132 = vrcp.pop %v979
  %v1133 = vrcp.pop %v980
  %v1134 = vrcp.pop %v981
  %v1135 = vrcp.pop %v982
  %v1136 = vrcp.pop %v983
  %v1137 = vrcp.pop %v984
  %v1138 = vrcp.pop %v985
  %v1139 = vrcp.pop %v986
  %v1140 = vrcp.pop %v987
  %v1141 = vrcp.pop %v988
  %v1142 = vmul.f32 %v1064, %v1126
  %v1143 = vmul.f32 %v1067, %v1127
  %v1144 = vmul.f32 %v1072, %v1128
  %v1145 = vmul.f32 %v1075, %v1129
  %v1146 = vmul.f32 %v1080, %v1130
  %v1147 = vmul.f32 %v1083, %v1131
  %v1148 = vmul.f32 %v1088, %v1132
  %v1149 = vmul.f32 %v1091, %v1133
  %v1150 = vmul.f32 %v1096, %v1134
  %v1151 = vmul.f32 %v1099, %v1135
  %v1152 = vmul.f32 %v1104, %v1136
  %v1153 = vmul.f32 %v1107, %v1137
  %v1154 = vmul.f32 %v1112, %v1138
  %v1155 = vmul.f32 %v1115, %v1139
  %v1156 = vmul.f32 %v1120, %v1140
  %v1157 = vmul.f32 %v1123, %v1141
  %1158 = vrot.lane.b32.xlu0 %v241, 96
  %v1159 = vpop.permute.xlu0 %1158
  %1160 = vrot.lane.b32.xlu0 %v242, 96
  %v1161 = vpop.permute.xlu0 %1160
  %1162 = vrot.lane.b32.xlu0 %v243, 96
  %v1163 = vpop.permute.xlu0 %1162
  %1164 = vrot.lane.b32.xlu0 %v244, 96
  %v1165 = vpop.permute.xlu0 %1164
  %1166 = vrot.lane.b32.xlu0 %v245, 96
  %v1167 = vpop.permute.xlu0 %1166
  %1168 = vrot.lane.b32.xlu0 %v246, 96
  %v1169 = vpop.permute.xlu0 %1168
  %1170 = vrot.lane.b32.xlu0 %v247, 96
  %v1171 = vpop.permute.xlu0 %1170
  %1172 = vrot.lane.b32.xlu0 %v248, 96
  %v1173 = vpop.permute.xlu0 %1172
  %1174 = vrot.lane.b32.xlu0 %v241, 32
  %v1175 = vpop.permute.xlu0 %1174
  %1176 = vrot.lane.b32.xlu0 %v242, 32
  %v1177 = vpop.permute.xlu0 %1176
  %1178 = vrot.lane.b32.xlu0 %v243, 32
  %v1179 = vpop.permute.xlu0 %1178
  %1180 = vrot.lane.b32.xlu0 %v244, 32
  %v1181 = vpop.permute.xlu0 %1180
  %1182 = vrot.lane.b32.xlu0 %v245, 32
  %v1183 = vpop.permute.xlu0 %1182
  %1184 = vrot.lane.b32.xlu0 %v246, 32
  %v1185 = vpop.permute.xlu0 %1184
  %1186 = vrot.lane.b32.xlu0 %v247, 32
  %v1187 = vpop.permute.xlu0 %1186
  %1188 = vrot.lane.b32.xlu0 %v248, 32
  %v1189 = vpop.permute.xlu0 %1188
  %v1191 = vsel %vm273, %v1159, 0
  %v1194 = vsel %vm273, %v1161, 0
  %v1197 = vsel %vm273, %v1163, 0
  %v1200 = vsel %vm273, %v1165, 0
  %v1203 = vsel %vm273, %v1167, 0
  %v1206 = vsel %vm273, %v1169, 0
  %v1209 = vsel %vm273, %v1171, 0
  %v1212 = vsel %vm273, %v1173, 0
  %v1215 = vsel %vm273, %v1175, 0
  %v1218 = vsel %vm273, %v1177, 0
  %v1221 = vsel %vm273, %v1179, 0
  %v1224 = vsel %vm273, %v1181, 0
  %v1227 = vsel %vm273, %v1183, 0
  %v1230 = vsel %vm273, %v1185, 0
  %v1233 = vsel %vm273, %v1187, 0
  %v1236 = vsel %vm273, %v1189, 0
  %1238 = vmatprep.subr.bf16.mxu0 0
  %1239 = vmatpush1.bf16.xpose.msra.mxu0 %v1236
  %1240 = vmatprep.subr.bf16.mxu0 0
  %1241 = vmatpush1.bf16.xpose.msra.mxu0 %v1233
  %1242 = vmatprep.subr.bf16.mxu0 0
  %1243 = vmatpush1.bf16.xpose.msra.mxu0 %v1230
  %1244 = vmatprep.subr.bf16.mxu0 0
  %1245 = vmatpush1.bf16.xpose.msra.mxu0 %v1227
  %1246 = vmatprep.subr.bf16.mxu0 0
  %1247 = vmatpush1.bf16.xpose.msra.mxu0 %v1224
  %1248 = vmatprep.subr.bf16.mxu0 0
  %1249 = vmatpush1.bf16.xpose.msra.mxu0 %v1221
  %1250 = vmatprep.subr.bf16.mxu0 0
  %1251 = vmatpush1.bf16.xpose.msra.mxu0 %v1218
  %1252 = vmatprep.subr.bf16.mxu0 0
  %1253 = vmatpush1.bf16.xpose.msra.mxu0 %v1215
  %1254 = vmatprep.subr.bf16.mxu0 0
  %1255 = vmatpush2.bf16.xpose.msra.mxu0 0
  %1256 = vmatprep.subr.bf16.mxu0 0
  %1257 = vmatpush2.bf16.xpose.msra.mxu0 0
  %1258 = vmatprep.subr.bf16.mxu0 0
  %1259 = vmatpush2.bf16.xpose.msra.mxu0 0
  %1260 = vmatprep.subr.bf16.mxu0 0
  %1261 = vmatpush2.bf16.xpose.msra.mxu0 0
  %1262 = vmatprep.subr.bf16.mxu0 0
  %1263 = vmatpush2.bf16.xpose.msra.mxu0 0
  %1264 = vmatprep.subr.bf16.mxu0 0
  %1265 = vmatpush2.bf16.xpose.msra.mxu0 0
  %1266 = vmatprep.subr.bf16.mxu0 0
  %1267 = vmatpush2.bf16.xpose.msra.mxu0 0
  %1268 = vmatprep.subr.bf16.mxu0 0
  %1269 = vmatpush2.bf16.xpose.msra.mxu0 0
  %1270 = vmatprep.mubr.bf16.mxu0 0
  %1271 = vmatmul.mubr.bf16.gmra.mxu0 %v1191
  %v1272 = vpop.f32.mrf.mxu0
  %v1273 = vadd.f32 0.0, %v1272
  %v1274 = vpop.f32.mrf.mxu0
  %v1275 = vpop.f32.mrf.mxu0
  %v1276 = vadd.f32 0.0, %v1275
  %v1277 = vpop.f32.mrf.mxu0
  %1278 = vmatprep.mubr.bf16.mxu0 0
  %1279 = vmatmul.mubr.bf16.gmra.mxu0 %v1194
  %v1280 = vpop.f32.mrf.mxu0
  %v1281 = vadd.f32 0.0, %v1280
  %v1282 = vpop.f32.mrf.mxu0
  %v1283 = vpop.f32.mrf.mxu0
  %v1284 = vadd.f32 0.0, %v1283
  %v1285 = vpop.f32.mrf.mxu0
  %1286 = vmatprep.mubr.bf16.mxu0 0
  %1287 = vmatmul.mubr.bf16.gmra.mxu0 %v1197
  %v1288 = vpop.f32.mrf.mxu0
  %v1289 = vadd.f32 0.0, %v1288
  %v1290 = vpop.f32.mrf.mxu0
  %v1291 = vpop.f32.mrf.mxu0
  %v1292 = vadd.f32 0.0, %v1291
  %v1293 = vpop.f32.mrf.mxu0
  %1294 = vmatprep.mubr.bf16.mxu0 0
  %1295 = vmatmul.mubr.bf16.gmra.mxu0 %v1200
  %v1296 = vpop.f32.mrf.mxu0
  %v1297 = vadd.f32 0.0, %v1296
  %v1298 = vpop.f32.mrf.mxu0
  %v1299 = vpop.f32.mrf.mxu0
  %v1300 = vadd.f32 0.0, %v1299
  %v1301 = vpop.f32.mrf.mxu0
  %1302 = vmatprep.mubr.bf16.mxu0 0
  %1303 = vmatmul.mubr.bf16.gmra.mxu0 %v1203
  %v1304 = vpop.f32.mrf.mxu0
  %v1305 = vadd.f32 0.0, %v1304
  %v1306 = vpop.f32.mrf.mxu0
  %v1307 = vpop.f32.mrf.mxu0
  %v1308 = vadd.f32 0.0, %v1307
  %v1309 = vpop.f32.mrf.mxu0
  %1310 = vmatprep.mubr.bf16.mxu0 0
  %1311 = vmatmul.mubr.bf16.gmra.mxu0 %v1206
  %v1312 = vpop.f32.mrf.mxu0
  %v1313 = vadd.f32 0.0, %v1312
  %v1314 = vpop.f32.mrf.mxu0
  %v1315 = vpop.f32.mrf.mxu0
  %v1316 = vadd.f32 0.0, %v1315
  %v1317 = vpop.f32.mrf.mxu0
  %1318 = vmatprep.mubr.bf16.mxu0 0
  %1319 = vmatmul.mubr.bf16.gmra.mxu0 %v1209
  %v1320 = vpop.f32.mrf.mxu0
  %v1321 = vadd.f32 0.0, %v1320
  %v1322 = vpop.f32.mrf.mxu0
  %v1323 = vpop.f32.mrf.mxu0
  %v1324 = vadd.f32 0.0, %v1323
  %v1325 = vpop.f32.mrf.mxu0
  %1326 = vmatprep.mubr.bf16.mxu0 0
  %1327 = vmatmul.mubr.bf16.gmra.mxu0 %v1212
  %v1328 = vpop.f32.mrf.mxu0
  %v1329 = vadd.f32 0.0, %v1328
  %v1330 = vpop.f32.mrf.mxu0
  %v1331 = vpop.f32.mrf.mxu0
  %v1332 = vadd.f32 0.0, %v1331
  %v1333 = vpop.f32.mrf.mxu0
  %1334 = vdwg.mxu0
  %v1335 = vmax.f32 %v1273, -10.0
  %v1336 = vmax.f32 %v1276, -10.0
  %v1337 = vmax.f32 %v1281, -10.0
  %v1338 = vmax.f32 %v1284, -10.0
  %v1339 = vmax.f32 %v1289, -10.0
  %v1340 = vmax.f32 %v1292, -10.0
  %v1341 = vmax.f32 %v1297, -10.0
  %v1342 = vmax.f32 %v1300, -10.0
  %v1343 = vmax.f32 %v1305, -10.0
  %v1344 = vmax.f32 %v1308, -10.0
  %v1345 = vmax.f32 %v1313, -10.0
  %v1346 = vmax.f32 %v1316, -10.0
  %v1347 = vmax.f32 %v1321, -10.0
  %v1348 = vmax.f32 %v1324, -10.0
  %v1349 = vmax.f32 %v1329, -10.0
  %v1350 = vmax.f32 %v1332, -10.0
  %v1351 = vmin.f32 %v1335, 10.0
  %v1352 = vmin.f32 %v1336, 10.0
  %v1353 = vmin.f32 %v1337, 10.0
  %v1354 = vmin.f32 %v1338, 10.0
  %v1355 = vmin.f32 %v1339, 10.0
  %v1356 = vmin.f32 %v1340, 10.0
  %v1357 = vmin.f32 %v1341, 10.0
  %v1358 = vmin.f32 %v1342, 10.0
  %v1359 = vmin.f32 %v1343, 10.0
  %v1360 = vmin.f32 %v1344, 10.0
  %v1361 = vmin.f32 %v1345, 10.0
  %v1362 = vmin.f32 %v1346, 10.0
  %v1363 = vmin.f32 %v1347, 10.0
  %v1364 = vmin.f32 %v1348, 10.0
  %v1365 = vmin.f32 %v1349, 10.0
  %v1366 = vmin.f32 %v1350, 10.0
  %v1367 = vmul.f32 %v1351, 1.442695
  %v1368 = vpow.pop %v1367
  %v1369 = vmul.f32 %v1352, 1.442695
  %v1370 = vpow.pop %v1369
  %v1371 = vmul.f32 %v1353, 1.442695
  %v1372 = vpow.pop %v1371
  %v1373 = vmul.f32 %v1354, 1.442695
  %v1374 = vpow.pop %v1373
  %v1375 = vmul.f32 %v1355, 1.442695
  %v1376 = vpow.pop %v1375
  %v1377 = vmul.f32 %v1356, 1.442695
  %v1378 = vpow.pop %v1377
  %v1379 = vmul.f32 %v1357, 1.442695
  %v1380 = vpow.pop %v1379
  %v1381 = vmul.f32 %v1358, 1.442695
  %v1382 = vpow.pop %v1381
  %v1383 = vmul.f32 %v1359, 1.442695
  %v1384 = vpow.pop %v1383
  %v1385 = vmul.f32 %v1360, 1.442695
  %v1386 = vpow.pop %v1385
  %v1387 = vmul.f32 %v1361, 1.442695
  %v1388 = vpow.pop %v1387
  %v1389 = vmul.f32 %v1362, 1.442695
  %v1390 = vpow.pop %v1389
  %v1391 = vmul.f32 %v1363, 1.442695
  %v1392 = vpow.pop %v1391
  %v1393 = vmul.f32 %v1364, 1.442695
  %v1394 = vpow.pop %v1393
  %v1395 = vmul.f32 %v1365, 1.442695
  %v1396 = vpow.pop %v1395
  %v1397 = vmul.f32 %v1366, 1.442695
  %v1398 = vpow.pop %v1397
  %v1399 = vmul.f32 %v1368, %v31
  %v1400 = vmul.f32 %v1370, %v32
  %v1401 = vmul.f32 %v1372, %v33
  %v1402 = vmul.f32 %v1374, %v34
  %v1403 = vmul.f32 %v1376, %v35
  %v1404 = vmul.f32 %v1378, %v36
  %v1405 = vmul.f32 %v1380, %v37
  %v1406 = vmul.f32 %v1382, %v38
  %v1407 = vmul.f32 %v1384, %v39
  %v1408 = vmul.f32 %v1386, %v40
  %v1409 = vmul.f32 %v1388, %v41
  %v1410 = vmul.f32 %v1390, %v42
  %v1411 = vmul.f32 %v1392, %v43
  %v1412 = vmul.f32 %v1394, %v44
  %v1413 = vmul.f32 %v1396, %v45
  %v1414 = vmul.f32 %v1398, %v46
  %1415 = vadd.xlane.f32.xlu0 %v1399
  %v1416 = vpop.xlane.xlu0 %1415
  %1417 = vadd.xlane.f32.xlu0 %v1400
  %v1418 = vpop.xlane.xlu0 %1417
  %1419 = vadd.xlane.f32.xlu0 %v1401
  %v1420 = vpop.xlane.xlu0 %1419
  %1421 = vadd.xlane.f32.xlu0 %v1402
  %v1422 = vpop.xlane.xlu0 %1421
  %1423 = vadd.xlane.f32.xlu0 %v1403
  %v1424 = vpop.xlane.xlu0 %1423
  %1425 = vadd.xlane.f32.xlu0 %v1404
  %v1426 = vpop.xlane.xlu0 %1425
  %1427 = vadd.xlane.f32.xlu0 %v1405
  %v1428 = vpop.xlane.xlu0 %1427
  %1429 = vadd.xlane.f32.xlu0 %v1406
  %v1430 = vpop.xlane.xlu0 %1429
  %1431 = vadd.xlane.f32.xlu0 %v1407
  %v1432 = vpop.xlane.xlu0 %1431
  %1433 = vadd.xlane.f32.xlu0 %v1408
  %v1434 = vpop.xlane.xlu0 %1433
  %1435 = vadd.xlane.f32.xlu0 %v1409
  %v1436 = vpop.xlane.xlu0 %1435
  %1437 = vadd.xlane.f32.xlu0 %v1410
  %v1438 = vpop.xlane.xlu0 %1437
  %1439 = vadd.xlane.f32.xlu0 %v1411
  %v1440 = vpop.xlane.xlu0 %1439
  %1441 = vadd.xlane.f32.xlu0 %v1412
  %v1442 = vpop.xlane.xlu0 %1441
  %1443 = vadd.xlane.f32.xlu0 %v1413
  %v1444 = vpop.xlane.xlu0 %1443
  %1445 = vadd.xlane.f32.xlu0 %v1414
  %v1446 = vpop.xlane.xlu0 %1445
  %v1447 = vadd.f32 %v1416, 1e-08
  %v1448 = vadd.f32 %v1418, 1e-08
  %v1449 = vadd.f32 %v1420, 1e-08
  %v1450 = vadd.f32 %v1422, 1e-08
  %v1451 = vadd.f32 %v1424, 1e-08
  %v1452 = vadd.f32 %v1426, 1e-08
  %v1453 = vadd.f32 %v1428, 1e-08
  %v1454 = vadd.f32 %v1430, 1e-08
  %v1455 = vadd.f32 %v1432, 1e-08
  %v1456 = vadd.f32 %v1434, 1e-08
  %v1457 = vadd.f32 %v1436, 1e-08
  %v1458 = vadd.f32 %v1438, 1e-08
  %v1459 = vadd.f32 %v1440, 1e-08
  %v1460 = vadd.f32 %v1442, 1e-08
  %v1461 = vadd.f32 %v1444, 1e-08
  %v1462 = vadd.f32 %v1446, 1e-08
  %v1463 = vpack.c.bf16 %v1400, %v1399
  %v1464 = vpack.c.bf16 %v1402, %v1401
  %v1465 = vpack.c.bf16 %v1404, %v1403
  %v1466 = vpack.c.bf16 %v1406, %v1405
  %v1467 = vpack.c.bf16 %v1408, %v1407
  %v1468 = vpack.c.bf16 %v1410, %v1409
  %v1469 = vpack.c.bf16 %v1412, %v1411
  %v1470 = vpack.c.bf16 %v1414, %v1413
  %1471 = vrot.lane.b32.xlu0 %v233, 96
  %v1472 = vpop.permute.xlu0 %1471
  %1473 = vrot.lane.b32.xlu0 %v234, 96
  %v1474 = vpop.permute.xlu0 %1473
  %1475 = vrot.lane.b32.xlu0 %v235, 96
  %v1476 = vpop.permute.xlu0 %1475
  %1477 = vrot.lane.b32.xlu0 %v236, 96
  %v1478 = vpop.permute.xlu0 %1477
  %1479 = vrot.lane.b32.xlu0 %v237, 96
  %v1480 = vpop.permute.xlu0 %1479
  %1481 = vrot.lane.b32.xlu0 %v238, 96
  %v1482 = vpop.permute.xlu0 %1481
  %1483 = vrot.lane.b32.xlu0 %v239, 96
  %v1484 = vpop.permute.xlu0 %1483
  %1485 = vrot.lane.b32.xlu0 %v240, 96
  %v1486 = vpop.permute.xlu0 %1485
  %1495 = vmatprep.subr.bf16.mxu0 0
  %1496 = vmatpush1.bf16.msra.mxu0 %v1486
  %1497 = vmatprep.subr.bf16.mxu0 0
  %1498 = vmatpush1.bf16.msra.mxu0 %v1484
  %1499 = vmatprep.subr.bf16.mxu0 0
  %1500 = vmatpush1.bf16.msra.mxu0 %v1482
  %1501 = vmatprep.subr.bf16.mxu0 0
  %1502 = vmatpush1.bf16.msra.mxu0 %v1480
  %1503 = vmatprep.subr.bf16.mxu0 0
  %1504 = vmatpush1.bf16.msra.mxu0 %v1478
  %1505 = vmatprep.subr.bf16.mxu0 0
  %1506 = vmatpush1.bf16.msra.mxu0 %v1476
  %1507 = vmatprep.subr.bf16.mxu0 0
  %1508 = vmatpush1.bf16.msra.mxu0 %v1474
  %1509 = vmatprep.subr.bf16.mxu0 0
  %1510 = vmatpush1.bf16.msra.mxu0 %v1472
  %1511 = vmatprep.subr.bf16.mxu0 0
  %1512 = vmatpush2.bf16.msra.mxu0 0
  %1513 = vmatprep.subr.bf16.mxu0 0
  %1514 = vmatpush2.bf16.msra.mxu0 0
  %1515 = vmatprep.subr.bf16.mxu0 0
  %1516 = vmatpush2.bf16.msra.mxu0 0
  %1517 = vmatprep.subr.bf16.mxu0 0
  %1518 = vmatpush2.bf16.msra.mxu0 0
  %1519 = vmatprep.subr.bf16.mxu0 0
  %1520 = vmatpush2.bf16.msra.mxu0 0
  %1521 = vmatprep.subr.bf16.mxu0 0
  %1522 = vmatpush2.bf16.msra.mxu0 0
  %1523 = vmatprep.subr.bf16.mxu0 0
  %1524 = vmatpush2.bf16.msra.mxu0 0
  %1525 = vmatprep.subr.bf16.mxu0 0
  %1526 = vmatpush2.bf16.msra.mxu0 0
  %1527 = vmatprep.mubr.bf16.mxu0 0
  %1528 = vmatmul.mubr.bf16.gmra.mxu0 %v1463
  %v1529 = vpop.f32.mrf.mxu0
  %v1530 = vadd.f32 0.0, %v1529
  %v1531 = vpop.f32.mrf.mxu0
  %v1532 = vpop.f32.mrf.mxu0
  %v1533 = vadd.f32 0.0, %v1532
  %v1534 = vpop.f32.mrf.mxu0
  %1535 = vmatprep.mubr.bf16.mxu0 0
  %1536 = vmatmul.mubr.bf16.gmra.mxu0 %v1464
  %v1537 = vpop.f32.mrf.mxu0
  %v1538 = vadd.f32 0.0, %v1537
  %v1539 = vpop.f32.mrf.mxu0
  %v1540 = vpop.f32.mrf.mxu0
  %v1541 = vadd.f32 0.0, %v1540
  %v1542 = vpop.f32.mrf.mxu0
  %1543 = vmatprep.mubr.bf16.mxu0 0
  %1544 = vmatmul.mubr.bf16.gmra.mxu0 %v1465
  %v1545 = vpop.f32.mrf.mxu0
  %v1546 = vadd.f32 0.0, %v1545
  %v1547 = vpop.f32.mrf.mxu0
  %v1548 = vpop.f32.mrf.mxu0
  %v1549 = vadd.f32 0.0, %v1548
  %v1550 = vpop.f32.mrf.mxu0
  %1551 = vmatprep.mubr.bf16.mxu0 0
  %1552 = vmatmul.mubr.bf16.gmra.mxu0 %v1466
  %v1553 = vpop.f32.mrf.mxu0
  %v1554 = vadd.f32 0.0, %v1553
  %v1555 = vpop.f32.mrf.mxu0
  %v1556 = vpop.f32.mrf.mxu0
  %v1557 = vadd.f32 0.0, %v1556
  %v1558 = vpop.f32.mrf.mxu0
  %1559 = vmatprep.mubr.bf16.mxu0 0
  %1560 = vmatmul.mubr.bf16.gmra.mxu0 %v1467
  %v1561 = vpop.f32.mrf.mxu0
  %v1562 = vadd.f32 0.0, %v1561
  %v1563 = vpop.f32.mrf.mxu0
  %v1564 = vpop.f32.mrf.mxu0
  %v1565 = vadd.f32 0.0, %v1564
  %v1566 = vpop.f32.mrf.mxu0
  %1567 = vmatprep.mubr.bf16.mxu0 0
  %1568 = vmatmul.mubr.bf16.gmra.mxu0 %v1468
  %v1569 = vpop.f32.mrf.mxu0
  %v1570 = vadd.f32 0.0, %v1569
  %v1571 = vpop.f32.mrf.mxu0
  %v1572 = vpop.f32.mrf.mxu0
  %v1573 = vadd.f32 0.0, %v1572
  %v1574 = vpop.f32.mrf.mxu0
  %1575 = vmatprep.mubr.bf16.mxu0 0
  %1576 = vmatmul.mubr.bf16.gmra.mxu0 %v1469
  %v1577 = vpop.f32.mrf.mxu0
  %v1578 = vadd.f32 0.0, %v1577
  %v1579 = vpop.f32.mrf.mxu0
  %v1580 = vpop.f32.mrf.mxu0
  %v1581 = vadd.f32 0.0, %v1580
  %v1582 = vpop.f32.mrf.mxu0
  %1583 = vmatprep.mubr.bf16.mxu0 0
  %1584 = vmatmul.mubr.bf16.gmra.mxu0 %v1470
  %v1585 = vpop.f32.mrf.mxu0
  %v1586 = vadd.f32 0.0, %v1585
  %v1587 = vpop.f32.mrf.mxu0
  %v1588 = vpop.f32.mrf.mxu0
  %v1589 = vadd.f32 0.0, %v1588
  %v1590 = vpop.f32.mrf.mxu0
  %1591 = vdwg.mxu0
  %v1592 = vrcp.pop %v1447
  %v1593 = vrcp.pop %v1448
  %v1594 = vrcp.pop %v1449
  %v1595 = vrcp.pop %v1450
  %v1596 = vrcp.pop %v1451
  %v1597 = vrcp.pop %v1452
  %v1598 = vrcp.pop %v1453
  %v1599 = vrcp.pop %v1454
  %v1600 = vrcp.pop %v1455
  %v1601 = vrcp.pop %v1456
  %v1602 = vrcp.pop %v1457
  %v1603 = vrcp.pop %v1458
  %v1604 = vrcp.pop %v1459
  %v1605 = vrcp.pop %v1460
  %v1606 = vrcp.pop %v1461
  %v1607 = vrcp.pop %v1462
  %v1608 = vmul.f32 %v1530, %v1592
  %v1609 = vmul.f32 %v1533, %v1593
  %v1610 = vmul.f32 %v1538, %v1594
  %v1611 = vmul.f32 %v1541, %v1595
  %v1612 = vmul.f32 %v1546, %v1596
  %v1613 = vmul.f32 %v1549, %v1597
  %v1614 = vmul.f32 %v1554, %v1598
  %v1615 = vmul.f32 %v1557, %v1599
  %v1616 = vmul.f32 %v1562, %v1600
  %v1617 = vmul.f32 %v1565, %v1601
  %v1618 = vmul.f32 %v1570, %v1602
  %v1619 = vmul.f32 %v1573, %v1603
  %v1620 = vmul.f32 %v1578, %v1604
  %v1621 = vmul.f32 %v1581, %v1605
  %v1622 = vmul.f32 %v1586, %v1606
  %v1623 = vmul.f32 %v1589, %v1607
  %1624 = vrot.lane.b32.xlu0 %v241, 80
  %v1625 = vpop.permute.xlu0 %1624
  %1626 = vrot.lane.b32.xlu0 %v242, 80
  %v1627 = vpop.permute.xlu0 %1626
  %1628 = vrot.lane.b32.xlu0 %v243, 80
  %v1629 = vpop.permute.xlu0 %1628
  %1630 = vrot.lane.b32.xlu0 %v244, 80
  %v1631 = vpop.permute.xlu0 %1630
  %1632 = vrot.lane.b32.xlu0 %v245, 80
  %v1633 = vpop.permute.xlu0 %1632
  %1634 = vrot.lane.b32.xlu0 %v246, 80
  %v1635 = vpop.permute.xlu0 %1634
  %1636 = vrot.lane.b32.xlu0 %v247, 80
  %v1637 = vpop.permute.xlu0 %1636
  %1638 = vrot.lane.b32.xlu0 %v248, 80
  %v1639 = vpop.permute.xlu0 %1638
  %1640 = vrot.lane.b32.xlu0 %v241, 16
  %v1641 = vpop.permute.xlu0 %1640
  %1642 = vrot.lane.b32.xlu0 %v242, 16
  %v1643 = vpop.permute.xlu0 %1642
  %1644 = vrot.lane.b32.xlu0 %v243, 16
  %v1645 = vpop.permute.xlu0 %1644
  %1646 = vrot.lane.b32.xlu0 %v244, 16
  %v1647 = vpop.permute.xlu0 %1646
  %1648 = vrot.lane.b32.xlu0 %v245, 16
  %v1649 = vpop.permute.xlu0 %1648
  %1650 = vrot.lane.b32.xlu0 %v246, 16
  %v1651 = vpop.permute.xlu0 %1650
  %1652 = vrot.lane.b32.xlu0 %v247, 16
  %v1653 = vpop.permute.xlu0 %1652
  %1654 = vrot.lane.b32.xlu0 %v248, 16
  %v1655 = vpop.permute.xlu0 %1654
  %v1657 = vsel %vm273, %v1625, 0
  %v1660 = vsel %vm273, %v1627, 0
  %v1663 = vsel %vm273, %v1629, 0
  %v1666 = vsel %vm273, %v1631, 0
  %v1669 = vsel %vm273, %v1633, 0
  %v1672 = vsel %vm273, %v1635, 0
  %v1675 = vsel %vm273, %v1637, 0
  %v1678 = vsel %vm273, %v1639, 0
  %v1681 = vsel %vm273, %v1641, 0
  %v1684 = vsel %vm273, %v1643, 0
  %v1687 = vsel %vm273, %v1645, 0
  %v1690 = vsel %vm273, %v1647, 0
  %v1693 = vsel %vm273, %v1649, 0
  %v1696 = vsel %vm273, %v1651, 0
  %v1699 = vsel %vm273, %v1653, 0
  %v1702 = vsel %vm273, %v1655, 0
  %1704 = vmatprep.subr.bf16.mxu0 0
  %1705 = vmatpush1.bf16.xpose.msra.mxu0 %v1702
  %1706 = vmatprep.subr.bf16.mxu0 0
  %1707 = vmatpush1.bf16.xpose.msra.mxu0 %v1699
  %1708 = vmatprep.subr.bf16.mxu0 0
  %1709 = vmatpush1.bf16.xpose.msra.mxu0 %v1696
  %1710 = vmatprep.subr.bf16.mxu0 0
  %1711 = vmatpush1.bf16.xpose.msra.mxu0 %v1693
  %1712 = vmatprep.subr.bf16.mxu0 0
  %1713 = vmatpush1.bf16.xpose.msra.mxu0 %v1690
  %1714 = vmatprep.subr.bf16.mxu0 0
  %1715 = vmatpush1.bf16.xpose.msra.mxu0 %v1687
  %1716 = vmatprep.subr.bf16.mxu0 0
  %1717 = vmatpush1.bf16.xpose.msra.mxu0 %v1684
  %1718 = vmatprep.subr.bf16.mxu0 0
  %1719 = vmatpush1.bf16.xpose.msra.mxu0 %v1681
  %1720 = vmatprep.subr.bf16.mxu0 0
  %1721 = vmatpush2.bf16.xpose.msra.mxu0 0
  %1722 = vmatprep.subr.bf16.mxu0 0
  %1723 = vmatpush2.bf16.xpose.msra.mxu0 0
  %1724 = vmatprep.subr.bf16.mxu0 0
  %1725 = vmatpush2.bf16.xpose.msra.mxu0 0
  %1726 = vmatprep.subr.bf16.mxu0 0
  %1727 = vmatpush2.bf16.xpose.msra.mxu0 0
  %1728 = vmatprep.subr.bf16.mxu0 0
  %1729 = vmatpush2.bf16.xpose.msra.mxu0 0
  %1730 = vmatprep.subr.bf16.mxu0 0
  %1731 = vmatpush2.bf16.xpose.msra.mxu0 0
  %1732 = vmatprep.subr.bf16.mxu0 0
  %1733 = vmatpush2.bf16.xpose.msra.mxu0 0
  %1734 = vmatprep.subr.bf16.mxu0 0
  %1735 = vmatpush2.bf16.xpose.msra.mxu0 0
  %1736 = vmatprep.mubr.bf16.mxu0 0
  %1737 = vmatmul.mubr.bf16.gmra.mxu0 %v1657
  %v1738 = vpop.f32.mrf.mxu0
  %v1739 = vadd.f32 0.0, %v1738
  %v1740 = vpop.f32.mrf.mxu0
  %v1741 = vpop.f32.mrf.mxu0
  %v1742 = vadd.f32 0.0, %v1741
  %v1743 = vpop.f32.mrf.mxu0
  %1744 = vmatprep.mubr.bf16.mxu0 0
  %1745 = vmatmul.mubr.bf16.gmra.mxu0 %v1660
  %v1746 = vpop.f32.mrf.mxu0
  %v1747 = vadd.f32 0.0, %v1746
  %v1748 = vpop.f32.mrf.mxu0
  %v1749 = vpop.f32.mrf.mxu0
  %v1750 = vadd.f32 0.0, %v1749
  %v1751 = vpop.f32.mrf.mxu0
  %1752 = vmatprep.mubr.bf16.mxu0 0
  %1753 = vmatmul.mubr.bf16.gmra.mxu0 %v1663
  %v1754 = vpop.f32.mrf.mxu0
  %v1755 = vadd.f32 0.0, %v1754
  %v1756 = vpop.f32.mrf.mxu0
  %v1757 = vpop.f32.mrf.mxu0
  %v1758 = vadd.f32 0.0, %v1757
  %v1759 = vpop.f32.mrf.mxu0
  %1760 = vmatprep.mubr.bf16.mxu0 0
  %1761 = vmatmul.mubr.bf16.gmra.mxu0 %v1666
  %v1762 = vpop.f32.mrf.mxu0
  %v1763 = vadd.f32 0.0, %v1762
  %v1764 = vpop.f32.mrf.mxu0
  %v1765 = vpop.f32.mrf.mxu0
  %v1766 = vadd.f32 0.0, %v1765
  %v1767 = vpop.f32.mrf.mxu0
  %1768 = vmatprep.mubr.bf16.mxu0 0
  %1769 = vmatmul.mubr.bf16.gmra.mxu0 %v1669
  %v1770 = vpop.f32.mrf.mxu0
  %v1771 = vadd.f32 0.0, %v1770
  %v1772 = vpop.f32.mrf.mxu0
  %v1773 = vpop.f32.mrf.mxu0
  %v1774 = vadd.f32 0.0, %v1773
  %v1775 = vpop.f32.mrf.mxu0
  %1776 = vmatprep.mubr.bf16.mxu0 0
  %1777 = vmatmul.mubr.bf16.gmra.mxu0 %v1672
  %v1778 = vpop.f32.mrf.mxu0
  %v1779 = vadd.f32 0.0, %v1778
  %v1780 = vpop.f32.mrf.mxu0
  %v1781 = vpop.f32.mrf.mxu0
  %v1782 = vadd.f32 0.0, %v1781
  %v1783 = vpop.f32.mrf.mxu0
  %1784 = vmatprep.mubr.bf16.mxu0 0
  %1785 = vmatmul.mubr.bf16.gmra.mxu0 %v1675
  %v1786 = vpop.f32.mrf.mxu0
  %v1787 = vadd.f32 0.0, %v1786
  %v1788 = vpop.f32.mrf.mxu0
  %v1789 = vpop.f32.mrf.mxu0
  %v1790 = vadd.f32 0.0, %v1789
  %v1791 = vpop.f32.mrf.mxu0
  %1792 = vmatprep.mubr.bf16.mxu0 0
  %1793 = vmatmul.mubr.bf16.gmra.mxu0 %v1678
  %v1794 = vpop.f32.mrf.mxu0
  %v1795 = vadd.f32 0.0, %v1794
  %v1796 = vpop.f32.mrf.mxu0
  %v1797 = vpop.f32.mrf.mxu0
  %v1798 = vadd.f32 0.0, %v1797
  %v1799 = vpop.f32.mrf.mxu0
  %1800 = vdwg.mxu0
  %v1801 = vmax.f32 %v1739, -10.0
  %v1802 = vmax.f32 %v1742, -10.0
  %v1803 = vmax.f32 %v1747, -10.0
  %v1804 = vmax.f32 %v1750, -10.0
  %v1805 = vmax.f32 %v1755, -10.0
  %v1806 = vmax.f32 %v1758, -10.0
  %v1807 = vmax.f32 %v1763, -10.0
  %v1808 = vmax.f32 %v1766, -10.0
  %v1809 = vmax.f32 %v1771, -10.0
  %v1810 = vmax.f32 %v1774, -10.0
  %v1811 = vmax.f32 %v1779, -10.0
  %v1812 = vmax.f32 %v1782, -10.0
  %v1813 = vmax.f32 %v1787, -10.0
  %v1814 = vmax.f32 %v1790, -10.0
  %v1815 = vmax.f32 %v1795, -10.0
  %v1816 = vmax.f32 %v1798, -10.0
  %v1817 = vmin.f32 %v1801, 10.0
  %v1818 = vmin.f32 %v1802, 10.0
  %v1819 = vmin.f32 %v1803, 10.0
  %v1820 = vmin.f32 %v1804, 10.0
  %v1821 = vmin.f32 %v1805, 10.0
  %v1822 = vmin.f32 %v1806, 10.0
  %v1823 = vmin.f32 %v1807, 10.0
  %v1824 = vmin.f32 %v1808, 10.0
  %v1825 = vmin.f32 %v1809, 10.0
  %v1826 = vmin.f32 %v1810, 10.0
  %v1827 = vmin.f32 %v1811, 10.0
  %v1828 = vmin.f32 %v1812, 10.0
  %v1829 = vmin.f32 %v1813, 10.0
  %v1830 = vmin.f32 %v1814, 10.0
  %v1831 = vmin.f32 %v1815, 10.0
  %v1832 = vmin.f32 %v1816, 10.0
  %v1833 = vmul.f32 %v1817, 1.442695
  %v1834 = vpow.pop %v1833
  %v1835 = vmul.f32 %v1818, 1.442695
  %v1836 = vpow.pop %v1835
  %v1837 = vmul.f32 %v1819, 1.442695
  %v1838 = vpow.pop %v1837
  %v1839 = vmul.f32 %v1820, 1.442695
  %v1840 = vpow.pop %v1839
  %v1841 = vmul.f32 %v1821, 1.442695
  %v1842 = vpow.pop %v1841
  %v1843 = vmul.f32 %v1822, 1.442695
  %v1844 = vpow.pop %v1843
  %v1845 = vmul.f32 %v1823, 1.442695
  %v1846 = vpow.pop %v1845
  %v1847 = vmul.f32 %v1824, 1.442695
  %v1848 = vpow.pop %v1847
  %v1849 = vmul.f32 %v1825, 1.442695
  %v1850 = vpow.pop %v1849
  %v1851 = vmul.f32 %v1826, 1.442695
  %v1852 = vpow.pop %v1851
  %v1853 = vmul.f32 %v1827, 1.442695
  %v1854 = vpow.pop %v1853
  %v1855 = vmul.f32 %v1828, 1.442695
  %v1856 = vpow.pop %v1855
  %v1857 = vmul.f32 %v1829, 1.442695
  %v1858 = vpow.pop %v1857
  %v1859 = vmul.f32 %v1830, 1.442695
  %v1860 = vpow.pop %v1859
  %v1861 = vmul.f32 %v1831, 1.442695
  %v1862 = vpow.pop %v1861
  %v1863 = vmul.f32 %v1832, 1.442695
  %v1864 = vpow.pop %v1863
  %v1865 = vmul.f32 %v1834, %v31
  %v1866 = vmul.f32 %v1836, %v32
  %v1867 = vmul.f32 %v1838, %v33
  %v1868 = vmul.f32 %v1840, %v34
  %v1869 = vmul.f32 %v1842, %v35
  %v1870 = vmul.f32 %v1844, %v36
  %v1871 = vmul.f32 %v1846, %v37
  %v1872 = vmul.f32 %v1848, %v38
  %v1873 = vmul.f32 %v1850, %v39
  %v1874 = vmul.f32 %v1852, %v40
  %v1875 = vmul.f32 %v1854, %v41
  %v1876 = vmul.f32 %v1856, %v42
  %v1877 = vmul.f32 %v1858, %v43
  %v1878 = vmul.f32 %v1860, %v44
  %v1879 = vmul.f32 %v1862, %v45
  %v1880 = vmul.f32 %v1864, %v46
  %1881 = vadd.xlane.f32.xlu0 %v1865
  %v1882 = vpop.xlane.xlu0 %1881
  %1883 = vadd.xlane.f32.xlu0 %v1866
  %v1884 = vpop.xlane.xlu0 %1883
  %1885 = vadd.xlane.f32.xlu0 %v1867
  %v1886 = vpop.xlane.xlu0 %1885
  %1887 = vadd.xlane.f32.xlu0 %v1868
  %v1888 = vpop.xlane.xlu0 %1887
  %1889 = vadd.xlane.f32.xlu0 %v1869
  %v1890 = vpop.xlane.xlu0 %1889
  %1891 = vadd.xlane.f32.xlu0 %v1870
  %v1892 = vpop.xlane.xlu0 %1891
  %1893 = vadd.xlane.f32.xlu0 %v1871
  %v1894 = vpop.xlane.xlu0 %1893
  %1895 = vadd.xlane.f32.xlu0 %v1872
  %v1896 = vpop.xlane.xlu0 %1895
  %1897 = vadd.xlane.f32.xlu0 %v1873
  %v1898 = vpop.xlane.xlu0 %1897
  %1899 = vadd.xlane.f32.xlu0 %v1874
  %v1900 = vpop.xlane.xlu0 %1899
  %1901 = vadd.xlane.f32.xlu0 %v1875
  %v1902 = vpop.xlane.xlu0 %1901
  %1903 = vadd.xlane.f32.xlu0 %v1876
  %v1904 = vpop.xlane.xlu0 %1903
  %1905 = vadd.xlane.f32.xlu0 %v1877
  %v1906 = vpop.xlane.xlu0 %1905
  %1907 = vadd.xlane.f32.xlu0 %v1878
  %v1908 = vpop.xlane.xlu0 %1907
  %1909 = vadd.xlane.f32.xlu0 %v1879
  %v1910 = vpop.xlane.xlu0 %1909
  %1911 = vadd.xlane.f32.xlu0 %v1880
  %v1912 = vpop.xlane.xlu0 %1911
  %v1913 = vadd.f32 %v1882, 1e-08
  %v1914 = vadd.f32 %v1884, 1e-08
  %v1915 = vadd.f32 %v1886, 1e-08
  %v1916 = vadd.f32 %v1888, 1e-08
  %v1917 = vadd.f32 %v1890, 1e-08
  %v1918 = vadd.f32 %v1892, 1e-08
  %v1919 = vadd.f32 %v1894, 1e-08
  %v1920 = vadd.f32 %v1896, 1e-08
  %v1921 = vadd.f32 %v1898, 1e-08
  %v1922 = vadd.f32 %v1900, 1e-08
  %v1923 = vadd.f32 %v1902, 1e-08
  %v1924 = vadd.f32 %v1904, 1e-08
  %v1925 = vadd.f32 %v1906, 1e-08
  %v1926 = vadd.f32 %v1908, 1e-08
  %v1927 = vadd.f32 %v1910, 1e-08
  %v1928 = vadd.f32 %v1912, 1e-08
  %v1929 = vpack.c.bf16 %v1866, %v1865
  %v1930 = vpack.c.bf16 %v1868, %v1867
  %v1931 = vpack.c.bf16 %v1870, %v1869
  %v1932 = vpack.c.bf16 %v1872, %v1871
  %v1933 = vpack.c.bf16 %v1874, %v1873
  %v1934 = vpack.c.bf16 %v1876, %v1875
  %v1935 = vpack.c.bf16 %v1878, %v1877
  %v1936 = vpack.c.bf16 %v1880, %v1879
  %1937 = vrot.lane.b32.xlu0 %v233, 80
  %v1938 = vpop.permute.xlu0 %1937
  %1939 = vrot.lane.b32.xlu0 %v234, 80
  %v1940 = vpop.permute.xlu0 %1939
  %1941 = vrot.lane.b32.xlu0 %v235, 80
  %v1942 = vpop.permute.xlu0 %1941
  %1943 = vrot.lane.b32.xlu0 %v236, 80
  %v1944 = vpop.permute.xlu0 %1943
  %1945 = vrot.lane.b32.xlu0 %v237, 80
  %v1946 = vpop.permute.xlu0 %1945
  %1947 = vrot.lane.b32.xlu0 %v238, 80
  %v1948 = vpop.permute.xlu0 %1947
  %1949 = vrot.lane.b32.xlu0 %v239, 80
  %v1950 = vpop.permute.xlu0 %1949
  %1951 = vrot.lane.b32.xlu0 %v240, 80
  %v1952 = vpop.permute.xlu0 %1951
  %1961 = vmatprep.subr.bf16.mxu0 0
  %1962 = vmatpush1.bf16.msra.mxu0 %v1952
  %1963 = vmatprep.subr.bf16.mxu0 0
  %1964 = vmatpush1.bf16.msra.mxu0 %v1950
  %1965 = vmatprep.subr.bf16.mxu0 0
  %1966 = vmatpush1.bf16.msra.mxu0 %v1948
  %1967 = vmatprep.subr.bf16.mxu0 0
  %1968 = vmatpush1.bf16.msra.mxu0 %v1946
  %1969 = vmatprep.subr.bf16.mxu0 0
  %1970 = vmatpush1.bf16.msra.mxu0 %v1944
  %1971 = vmatprep.subr.bf16.mxu0 0
  %1972 = vmatpush1.bf16.msra.mxu0 %v1942
  %1973 = vmatprep.subr.bf16.mxu0 0
  %1974 = vmatpush1.bf16.msra.mxu0 %v1940
  %1975 = vmatprep.subr.bf16.mxu0 0
  %1976 = vmatpush1.bf16.msra.mxu0 %v1938
  %1977 = vmatprep.subr.bf16.mxu0 0
  %1978 = vmatpush2.bf16.msra.mxu0 0
  %1979 = vmatprep.subr.bf16.mxu0 0
  %1980 = vmatpush2.bf16.msra.mxu0 0
  %1981 = vmatprep.subr.bf16.mxu0 0
  %1982 = vmatpush2.bf16.msra.mxu0 0
  %1983 = vmatprep.subr.bf16.mxu0 0
  %1984 = vmatpush2.bf16.msra.mxu0 0
  %1985 = vmatprep.subr.bf16.mxu0 0
  %1986 = vmatpush2.bf16.msra.mxu0 0
  %1987 = vmatprep.subr.bf16.mxu0 0
  %1988 = vmatpush2.bf16.msra.mxu0 0
  %1989 = vmatprep.subr.bf16.mxu0 0
  %1990 = vmatpush2.bf16.msra.mxu0 0
  %1991 = vmatprep.subr.bf16.mxu0 0
  %1992 = vmatpush2.bf16.msra.mxu0 0
  %1993 = vmatprep.mubr.bf16.mxu0 0
  %1994 = vmatmul.mubr.bf16.gmra.mxu0 %v1929
  %v1995 = vpop.f32.mrf.mxu0
  %v1996 = vadd.f32 0.0, %v1995
  %v1997 = vpop.f32.mrf.mxu0
  %v1998 = vpop.f32.mrf.mxu0
  %v1999 = vadd.f32 0.0, %v1998
  %v2000 = vpop.f32.mrf.mxu0
  %2001 = vmatprep.mubr.bf16.mxu0 0
  %2002 = vmatmul.mubr.bf16.gmra.mxu0 %v1930
  %v2003 = vpop.f32.mrf.mxu0
  %v2004 = vadd.f32 0.0, %v2003
  %v2005 = vpop.f32.mrf.mxu0
  %v2006 = vpop.f32.mrf.mxu0
  %v2007 = vadd.f32 0.0, %v2006
  %v2008 = vpop.f32.mrf.mxu0
  %2009 = vmatprep.mubr.bf16.mxu0 0
  %2010 = vmatmul.mubr.bf16.gmra.mxu0 %v1931
  %v2011 = vpop.f32.mrf.mxu0
  %v2012 = vadd.f32 0.0, %v2011
  %v2013 = vpop.f32.mrf.mxu0
  %v2014 = vpop.f32.mrf.mxu0
  %v2015 = vadd.f32 0.0, %v2014
  %v2016 = vpop.f32.mrf.mxu0
  %2017 = vmatprep.mubr.bf16.mxu0 0
  %2018 = vmatmul.mubr.bf16.gmra.mxu0 %v1932
  %v2019 = vpop.f32.mrf.mxu0
  %v2020 = vadd.f32 0.0, %v2019
  %v2021 = vpop.f32.mrf.mxu0
  %v2022 = vpop.f32.mrf.mxu0
  %v2023 = vadd.f32 0.0, %v2022
  %v2024 = vpop.f32.mrf.mxu0
  %2025 = vmatprep.mubr.bf16.mxu0 0
  %2026 = vmatmul.mubr.bf16.gmra.mxu0 %v1933
  %v2027 = vpop.f32.mrf.mxu0
  %v2028 = vadd.f32 0.0, %v2027
  %v2029 = vpop.f32.mrf.mxu0
  %v2030 = vpop.f32.mrf.mxu0
  %v2031 = vadd.f32 0.0, %v2030
  %v2032 = vpop.f32.mrf.mxu0
  %2033 = vmatprep.mubr.bf16.mxu0 0
  %2034 = vmatmul.mubr.bf16.gmra.mxu0 %v1934
  %v2035 = vpop.f32.mrf.mxu0
  %v2036 = vadd.f32 0.0, %v2035
  %v2037 = vpop.f32.mrf.mxu0
  %v2038 = vpop.f32.mrf.mxu0
  %v2039 = vadd.f32 0.0, %v2038
  %v2040 = vpop.f32.mrf.mxu0
  %2041 = vmatprep.mubr.bf16.mxu0 0
  %2042 = vmatmul.mubr.bf16.gmra.mxu0 %v1935
  %v2043 = vpop.f32.mrf.mxu0
  %v2044 = vadd.f32 0.0, %v2043
  %v2045 = vpop.f32.mrf.mxu0
  %v2046 = vpop.f32.mrf.mxu0
  %v2047 = vadd.f32 0.0, %v2046
  %v2048 = vpop.f32.mrf.mxu0
  %2049 = vmatprep.mubr.bf16.mxu0 0
  %2050 = vmatmul.mubr.bf16.gmra.mxu0 %v1936
  %v2051 = vpop.f32.mrf.mxu0
  %v2052 = vadd.f32 0.0, %v2051
  %v2053 = vpop.f32.mrf.mxu0
  %v2054 = vpop.f32.mrf.mxu0
  %v2055 = vadd.f32 0.0, %v2054
  %v2056 = vpop.f32.mrf.mxu0
  %2057 = vdwg.mxu0
  %v2058 = vrcp.pop %v1913
  %v2059 = vrcp.pop %v1914
  %v2060 = vrcp.pop %v1915
  %v2061 = vrcp.pop %v1916
  %v2062 = vrcp.pop %v1917
  %v2063 = vrcp.pop %v1918
  %v2064 = vrcp.pop %v1919
  %v2065 = vrcp.pop %v1920
  %v2066 = vrcp.pop %v1921
  %v2067 = vrcp.pop %v1922
  %v2068 = vrcp.pop %v1923
  %v2069 = vrcp.pop %v1924
  %v2070 = vrcp.pop %v1925
  %v2071 = vrcp.pop %v1926
  %v2072 = vrcp.pop %v1927
  %v2073 = vrcp.pop %v1928
  %v2074 = vmul.f32 %v1996, %v2058
  %v2075 = vmul.f32 %v1999, %v2059
  %v2076 = vmul.f32 %v2004, %v2060
  %v2077 = vmul.f32 %v2007, %v2061
  %v2078 = vmul.f32 %v2012, %v2062
  %v2079 = vmul.f32 %v2015, %v2063
  %v2080 = vmul.f32 %v2020, %v2064
  %v2081 = vmul.f32 %v2023, %v2065
  %v2082 = vmul.f32 %v2028, %v2066
  %v2083 = vmul.f32 %v2031, %v2067
  %v2084 = vmul.f32 %v2036, %v2068
  %v2085 = vmul.f32 %v2039, %v2069
  %v2086 = vmul.f32 %v2044, %v2070
  %v2087 = vmul.f32 %v2047, %v2071
  %v2088 = vmul.f32 %v2052, %v2072
  %v2089 = vmul.f32 %v2055, %v2073
  %2106 = vrot.lane.b32.xlu0 %v1142, 16
  %v2107 = vpop.permute.xlu0 %2106
  %2108 = vrot.lane.b32.xlu0 %v1143, 16
  %v2109 = vpop.permute.xlu0 %2108
  %2110 = vrot.lane.b32.xlu0 %v1144, 16
  %v2111 = vpop.permute.xlu0 %2110
  %2112 = vrot.lane.b32.xlu0 %v1145, 16
  %v2113 = vpop.permute.xlu0 %2112
  %2114 = vrot.lane.b32.xlu0 %v1146, 16
  %v2115 = vpop.permute.xlu0 %2114
  %2116 = vrot.lane.b32.xlu0 %v1147, 16
  %v2117 = vpop.permute.xlu0 %2116
  %2118 = vrot.lane.b32.xlu0 %v1148, 16
  %v2119 = vpop.permute.xlu0 %2118
  %2120 = vrot.lane.b32.xlu0 %v1149, 16
  %v2121 = vpop.permute.xlu0 %2120
  %2122 = vrot.lane.b32.xlu0 %v1150, 16
  %v2123 = vpop.permute.xlu0 %2122
  %2124 = vrot.lane.b32.xlu0 %v1151, 16
  %v2125 = vpop.permute.xlu0 %2124
  %2126 = vrot.lane.b32.xlu0 %v1152, 16
  %v2127 = vpop.permute.xlu0 %2126
  %2128 = vrot.lane.b32.xlu0 %v1153, 16
  %v2129 = vpop.permute.xlu0 %2128
  %2130 = vrot.lane.b32.xlu0 %v1154, 16
  %v2131 = vpop.permute.xlu0 %2130
  %2132 = vrot.lane.b32.xlu0 %v1155, 16
  %v2133 = vpop.permute.xlu0 %2132
  %2134 = vrot.lane.b32.xlu0 %v1156, 16
  %v2135 = vpop.permute.xlu0 %2134
  %2136 = vrot.lane.b32.xlu0 %v1157, 16
  %v2137 = vpop.permute.xlu0 %2136
  %2170 = vrot.lane.b32.xlu0 %v1608, 32
  %v2171 = vpop.permute.xlu0 %2170
  %2172 = vrot.lane.b32.xlu0 %v1609, 32
  %v2173 = vpop.permute.xlu0 %2172
  %2174 = vrot.lane.b32.xlu0 %v1610, 32
  %v2175 = vpop.permute.xlu0 %2174
  %2176 = vrot.lane.b32.xlu0 %v1611, 32
  %v2177 = vpop.permute.xlu0 %2176
  %2178 = vrot.lane.b32.xlu0 %v1612, 32
  %v2179 = vpop.permute.xlu0 %2178
  %2180 = vrot.lane.b32.xlu0 %v1613, 32
  %v2181 = vpop.permute.xlu0 %2180
  %2182 = vrot.lane.b32.xlu0 %v1614, 32
  %v2183 = vpop.permute.xlu0 %2182
  %2184 = vrot.lane.b32.xlu0 %v1615, 32
  %v2185 = vpop.permute.xlu0 %2184
  %2186 = vrot.lane.b32.xlu0 %v1616, 32
  %v2187 = vpop.permute.xlu0 %2186
  %2188 = vrot.lane.b32.xlu0 %v1617, 32
  %v2189 = vpop.permute.xlu0 %2188
  %2190 = vrot.lane.b32.xlu0 %v1618, 32
  %v2191 = vpop.permute.xlu0 %2190
  %2192 = vrot.lane.b32.xlu0 %v1619, 32
  %v2193 = vpop.permute.xlu0 %2192
  %2194 = vrot.lane.b32.xlu0 %v1620, 32
  %v2195 = vpop.permute.xlu0 %2194
  %2196 = vrot.lane.b32.xlu0 %v1621, 32
  %v2197 = vpop.permute.xlu0 %2196
  %2198 = vrot.lane.b32.xlu0 %v1622, 32
  %v2199 = vpop.permute.xlu0 %2198
  %2200 = vrot.lane.b32.xlu0 %v1623, 32
  %v2201 = vpop.permute.xlu0 %2200
  %2234 = vrot.lane.b32.xlu0 %v2074, 48
  %v2235 = vpop.permute.xlu0 %2234
  %2236 = vrot.lane.b32.xlu0 %v2075, 48
  %v2237 = vpop.permute.xlu0 %2236
  %2238 = vrot.lane.b32.xlu0 %v2076, 48
  %v2239 = vpop.permute.xlu0 %2238
  %2240 = vrot.lane.b32.xlu0 %v2077, 48
  %v2241 = vpop.permute.xlu0 %2240
  %2242 = vrot.lane.b32.xlu0 %v2078, 48
  %v2243 = vpop.permute.xlu0 %2242
  %2244 = vrot.lane.b32.xlu0 %v2079, 48
  %v2245 = vpop.permute.xlu0 %2244
  %2246 = vrot.lane.b32.xlu0 %v2080, 48
  %v2247 = vpop.permute.xlu0 %2246
  %2248 = vrot.lane.b32.xlu0 %v2081, 48
  %v2249 = vpop.permute.xlu0 %2248
  %2250 = vrot.lane.b32.xlu0 %v2082, 48
  %v2251 = vpop.permute.xlu0 %2250
  %2252 = vrot.lane.b32.xlu0 %v2083, 48
  %v2253 = vpop.permute.xlu0 %2252
  %2254 = vrot.lane.b32.xlu0 %v2084, 48
  %v2255 = vpop.permute.xlu0 %2254
  %2256 = vrot.lane.b32.xlu0 %v2085, 48
  %v2257 = vpop.permute.xlu0 %2256
  %2258 = vrot.lane.b32.xlu0 %v2086, 48
  %v2259 = vpop.permute.xlu0 %2258
  %2260 = vrot.lane.b32.xlu0 %v2087, 48
  %v2261 = vpop.permute.xlu0 %2260
  %2262 = vrot.lane.b32.xlu0 %v2088, 48
  %v2263 = vpop.permute.xlu0 %2262
  %2264 = vrot.lane.b32.xlu0 %v2089, 48
  %v2265 = vpop.permute.xlu0 %2264
  %v2282 = vsel %vm273, %v668, %v2107
  %v2283 = vsel %vm273, %v669, %v2109
  %v2284 = vsel %vm273, %v670, %v2111
  %v2285 = vsel %vm273, %v671, %v2113
  %v2286 = vsel %vm273, %v672, %v2115
  %v2287 = vsel %vm273, %v673, %v2117
  %v2288 = vsel %vm273, %v674, %v2119
  %v2289 = vsel %vm273, %v675, %v2121
  %v2290 = vsel %vm273, %v676, %v2123
  %v2291 = vsel %vm273, %v677, %v2125
  %v2292 = vsel %vm273, %v678, %v2127
  %v2293 = vsel %vm273, %v679, %v2129
  %v2294 = vsel %vm273, %v680, %v2131
  %v2295 = vsel %vm273, %v681, %v2133
  %v2296 = vsel %vm273, %v682, %v2135
  %v2297 = vsel %vm273, %v683, %v2137
  %vm2298 = vcmask 261120
  %v2299 = vsel %vm2298, %v2282, %v2171
  %v2300 = vsel %vm2298, %v2283, %v2173
  %v2301 = vsel %vm2298, %v2284, %v2175
  %v2302 = vsel %vm2298, %v2285, %v2177
  %v2303 = vsel %vm2298, %v2286, %v2179
  %v2304 = vsel %vm2298, %v2287, %v2181
  %v2305 = vsel %vm2298, %v2288, %v2183
  %v2306 = vsel %vm2298, %v2289, %v2185
  %v2307 = vsel %vm2298, %v2290, %v2187
  %v2308 = vsel %vm2298, %v2291, %v2189
  %v2309 = vsel %vm2298, %v2292, %v2191
  %v2310 = vsel %vm2298, %v2293, %v2193
  %v2311 = vsel %vm2298, %v2294, %v2195
  %v2312 = vsel %vm2298, %v2295, %v2197
  %v2313 = vsel %vm2298, %v2296, %v2199
  %v2314 = vsel %vm2298, %v2297, %v2201
  %vm2315 = vcmask 392192
  %v2316 = vsel %vm2315, %v2299, %v2235
  %v2317 = vsel %vm2315, %v2300, %v2237
  %v2318 = vsel %vm2315, %v2301, %v2239
  %v2319 = vsel %vm2315, %v2302, %v2241
  %v2320 = vsel %vm2315, %v2303, %v2243
  %v2321 = vsel %vm2315, %v2304, %v2245
  %v2322 = vsel %vm2315, %v2305, %v2247
  %v2323 = vsel %vm2315, %v2306, %v2249
  %v2324 = vsel %vm2315, %v2307, %v2251
  %v2325 = vsel %vm2315, %v2308, %v2253
  %v2326 = vsel %vm2315, %v2309, %v2255
  %v2327 = vsel %vm2315, %v2310, %v2257
  %v2328 = vsel %vm2315, %v2311, %v2259
  %v2329 = vsel %vm2315, %v2312, %v2261
  %v2330 = vsel %vm2315, %v2313, %v2263
  %v2331 = vsel %vm2315, %v2314, %v2265
  %2332 = vst.msk [vmem:[%s3] sm:$0xff] %vm95, %v2316
  %2333 = vst.msk [vmem:[%s3 + $0x8] sm:$0xff] %vm95, %v2317
  %2334 = vst.msk [vmem:[%s3 + $0x10] sm:$0xff] %vm95, %v2318
  %2335 = vst.msk [vmem:[%s3 + $0x18] sm:$0xff] %vm95, %v2319
  %2336 = vst.msk [vmem:[%s3 + $0x20] sm:$0xff] %vm95, %v2320
  %2337 = vst.msk [vmem:[%s3 + $0x28] sm:$0xff] %vm95, %v2321
  %2338 = vst.msk [vmem:[%s3 + $0x30] sm:$0xff] %vm95, %v2322
  %2339 = vst.msk [vmem:[%s3 + $0x38] sm:$0xff] %vm95, %v2323
  %2340 = vst.msk [vmem:[%s3 + $0x40] sm:$0xff] %vm95, %v2324
  %2341 = vst.msk [vmem:[%s3 + $0x48] sm:$0xff] %vm95, %v2325
  %2342 = vst.msk [vmem:[%s3 + $0x50] sm:$0xff] %vm95, %v2326
  %2343 = vst.msk [vmem:[%s3 + $0x58] sm:$0xff] %vm95, %v2327
  %2344 = vst.msk [vmem:[%s3 + $0x60] sm:$0xff] %vm95, %v2328
  %2345 = vst.msk [vmem:[%s3 + $0x68] sm:$0xff] %vm95, %v2329
  %2346 = vst.msk [vmem:[%s3 + $0x70] sm:$0xff] %vm95, %v2330
  %2347 = vst.msk [vmem:[%s3 + $0x78] sm:$0xff] %vm95, %v2331
  // Predicated region
  $region14: #{tpu_custom_call.1} parent=0 // pred_check
    _
  $region15: #{tpu_custom_call.1} parent=0 // pred_check_branch
    %2349 = sbr.rel (0) target = $region17
  $region16: #{tpu_custom_call.1} parent=0 // pred_region
    _
  $region17: #{tpu_custom_call.1} parent=0 // pred_fallthru
    _
  // Predicated region
  $region18: #{tpu_custom_call.1} parent=0 // pred_check
    _
  $region19: #{tpu_custom_call.1} parent=0 // pred_check_branch
    %2351 = sbr.rel (0) target = $region21
  $region20: #{tpu_custom_call.1} parent=0 // pred_region
    _
  $region21: #{tpu_custom_call.1} parent=0 // pred_fallthru
    _

</llo_original>
